<compile_context>
chip_gen: v7x
topology: tpu7x:2x2x1
jax: 0.10.0
libtpu: 0.0.40
codegen_flags: <defaults>
</compile_context>

<pallas_src>
import functools
import math

import numpy as np

import jax
import jax.numpy as jnp
from jax import lax
from jax.experimental import pallas as pl
from jax.experimental.pallas import tpu as pltpu


def _interp_matrix_np(n_in: int, n_out: int) -> np.ndarray:
    """Dense (n_out, n_in) bilinear weight matrix, align_corners=True (host f64 -> f32)."""
    if n_out == 1:
        src = np.zeros((1,), np.float64)
    else:
        src = np.arange(n_out, dtype=np.float64) * (n_in - 1) / (n_out - 1)
    lo = np.clip(np.floor(src).astype(np.int64), 0, n_in - 1)
    hi = np.clip(lo + 1, 0, n_in - 1)
    frac = src - lo
    w = np.zeros((n_out, n_in), np.float64)
    rows = np.arange(n_out)
    w[rows, lo] += 1.0 - frac
    w[rows, hi] += frac
    return w.astype(np.float32)


def _vmem_capacity_bytes() -> int:
    try:
        cap = getattr(pltpu.get_tpu_info(), "vmem_capacity_bytes", None)
        if cap:
            return int(cap)
    except Exception:
        pass
    return 64 << 20   # conservative default (v7x per-core physical VMEM)


def _resize_kernel(x_ref, wy_ref, wxt_ref, o_ref, acc_ref, *,
                   tile_k, n_k, w_in, height_first, ragged_k):
    # x_ref:   (H, tile_k)      one channel's chunk of input columns (native dtype)
    # wy_ref:  (h_out, H)       bf16 height-interp weights, *255 folded in
    # wxt_ref: (k_pad, w_pad)   bf16 width-interp weights (rows >= W are zero)
    # o_ref:   (h_out, w_pad)   bf16 resized channel
    # acc_ref: f32 accumulator: (h_out, w_pad) if height_first else (H, w_pad)
    k = pl.program_id(1)

    @pl.when(k == 0)
    def _():
        acc_ref[...] = jnp.zeros_like(acc_ref)

    x = x_ref[...].astype(jnp.bfloat16)           # cast on the VMEM tile (input dtype
    if ragged_k:                                  # only sets HBM traffic, not compute)
        # last chunk may read past W: zero the out-of-range columns so garbage
        # (potentially NaN) never reaches the MXU.
        col = k * tile_k + lax.broadcasted_iota(jnp.int32, (1, tile_k), 1)
        x = jnp.where(col < w_in, x, 0)

    if n_k > 1:
        k0 = pl.multiple_of(k * tile_k, 128)
        wxt_k = wxt_ref[pl.ds(k0, tile_k), :]     # (tile_k, w_pad), tile-aligned slice
    else:
        wxt_k = wxt_ref[...]

    if height_first:
        # Per chunk: height interp (+ folded *255), then width interp, accumulated.
        t = jnp.dot(wy_ref[...], x, preferred_element_type=jnp.float32)
        acc_ref[...] += jnp.dot(t.astype(jnp.bfloat16), wxt_k,
                                preferred_element_type=jnp.float32)

        @pl.when(k == n_k - 1)
        def _():
            o_ref[...] = acc_ref[...].astype(o_ref.dtype)
    else:
        # Per chunk: width interp accumulated; height interp once at the end.
        acc_ref[...] += jnp.dot(x, wxt_k, preferred_element_type=jnp.float32)

        @pl.when(k == n_k - 1)
        def _():
            o_ref[...] = jnp.dot(
                wy_ref[...], acc_ref[...].astype(jnp.bfloat16),
                preferred_element_type=jnp.float32).astype(o_ref.dtype)


def bilinear_resize_x255(x, h_out: int, w_out: int, *,
                         k_target: int = 256, out_dtype=jnp.bfloat16):
    """x: (C, H, W) values in [0,1] -> (C, h_out, w_out) == interpolate(255*x, align_corners=True).

    Feed x in the narrowest dtype available (e.g. bf16 camera frames); the kernel
    casts each chunk in VMEM, so the input dtype directly sets HBM read traffic.
    """
    C, H, W = x.shape
    w_pad = max(-(-w_out // 128) * 128, 128)      # lane/MXU-aligned output columns

    # Chunk the input width so the image read is pipelined (double-buffered)
    # against MXU work and the resident working set stays bounded (v7x).
    if W <= k_target:
        tile_k, n_k = W, 1
    else:
        tile_k = k_target                         # multiple of 128
        n_k = -(-W // tile_k)
    k_pad = n_k * tile_k
    ragged_k = k_pad != W

    # Stage order by FLOP count (visible on v5e, hidden under HBM on v6e/v7x):
    fl_hf = 2 * h_out * W * (H + w_pad)           # height-first, chunked over W
    fl_wf = 2 * H * w_pad * (W + h_out)           # width-first, accumulate T over W
    height_first = fl_hf <= fl_wf

    # *255 folded into the height weights; bf16 MXU operands, f32 accumulation.
    wy = jnp.asarray(_interp_matrix_np(H, h_out) * 255.0, dtype=jnp.bfloat16)
    wxt_np = np.zeros((k_pad, w_pad), np.float32)
    wxt_np[:W, :w_out] = _interp_matrix_np(W, w_out).T
    wxt = jnp.asarray(wxt_np, dtype=jnp.bfloat16)

    acc_rows = h_out if height_first else H
    in_bytes = np.dtype(x.dtype).itemsize
    out_bytes = np.dtype(out_dtype).itemsize

    # Per-generation VMEM budget. wy/wxt are constant-index blocks: fetched from
    # HBM once (index never changes) but still double-buffered by the pipeline;
    # they are small, so just account for both buffers.
    working = (2 * H * tile_k * in_bytes          # image chunk, double-buffered
               + 2 * h_out * H * 2                # wy
               + 2 * k_pad * w_pad * 2            # wxt
               + 2 * h_out * w_pad * out_bytes    # output block
               + acc_rows * w_pad * 4)            # f32 accumulator scratch
    if height_first:
        working += h_out * tile_k * 6             # per-chunk t (f32 + bf16 copy)
    vmem_limit = int(min(int(0.85 * _vmem_capacity_bytes()),
                         max(int(1.5 * working), 32 << 20)))

    flops = C * (fl_hf if height_first else fl_wf)
    bytes_accessed = (C * H * W * in_bytes + wy.size * 2 + wxt.size * 2
                      + C * h_out * w_pad * out_bytes)
    cost = pl.CostEstimate(flops=int(flops), transcendentals=0,
                           bytes_accessed=int(bytes_accessed))

    kernel = functools.partial(_resize_kernel, tile_k=tile_k, n_k=n_k, w_in=W,
                               height_first=height_first, ragged_k=ragged_k)

    out_padded = pl.pallas_call(
        kernel,
        out_shape=jax.ShapeDtypeStruct((C, h_out, w_pad), out_dtype),
        grid=(C, n_k),                                                # (parallel, reduction)
        in_specs=[
            pl.BlockSpec((None, H, tile_k), lambda c, k: (c, 0, k)),  # image W-chunk
            pl.BlockSpec((h_out, H), lambda c, k: (0, 0)),            # wy (constant)
            pl.BlockSpec((k_pad, w_pad), lambda c, k: (0, 0)),        # wxt (constant)
        ],
        out_specs=pl.BlockSpec((None, h_out, w_pad), lambda c, k: (c, 0, 0)),
        scratch_shapes=[pltpu.VMEM((acc_rows, w_pad), jnp.float32)],
        compiler_params=pltpu.CompilerParams(
            dimension_semantics=("parallel", "arbitrary"),
            vmem_limit_bytes=vmem_limit),
        cost_estimate=cost,
    )(x, wy, wxt)

    return out_padded[:, :, :w_out]


def _stub_detector(x_chw):
    # TODO(synk): the real `self.model` is an externally exported int8 torchscript
    # detection predictor (no clean Pallas equivalent); deterministic stand-in
    # producing (boxes, labels, scores) with the same structure so the Wrapper's
    # post-processing can be exercised.
    _, h, w = x_chw.shape
    boxes = jnp.array([[0.0, 0.0, float(w - 1), float(h - 1)]], jnp.float32)
    labels = jnp.zeros((1,), jnp.int32)
    scores = jnp.clip(jnp.mean(x_chw.astype(jnp.float32)) / 255.0, 0.0, 1.0)[None]
    return boxes, labels, scores


def wrapper_forward(inputs):
    """inputs: list of (C, H, W) arrays with values in [0, 1]."""
    x0 = inputs[0]
    _, H, W = x0.shape

    # unsqueeze(0)*255 + bilinear resize (batch dim of size 1 is pure glue;
    # the *255 is folded into the height weights inside the kernel).
    scale = 320.0 / min(H, W)
    # recompute_scale_factor=True -> output size = floor(in_size * scale)
    h_out = int(math.floor(H * scale))
    w_out = int(math.floor(W * scale))
    x_resized = bilinear_resize_x255(x0, h_out, w_out)   # (C, h_out, w_out) bf16

    out = _stub_detector(x_resized)                      # model(x[0])

    coco_idx = jnp.array([1], dtype=jnp.int32)           # from __init__: coco_idx_list=[1]
    res = {
        "boxes": out[0] / scale,                         # out[0] / scale
        "labels": jnp.take(coco_idx, out[1], axis=0),    # index_select(coco_idx, 0, out[1])
        "scores": out[2],
    }
    return (inputs, [res])


if __name__ == "__main__":
    key0 = jax.random.PRNGKey(0)
    k_img, k_img2 = jax.random.split(key0)

    # Camera-style frame supplied in a narrow dtype (bf16) so the kernel's HBM
    # read is half of f32; values in [0, 1] as the module expects.
    C, H, W = 3, 16, 16
    img = jax.random.uniform(k_img, (C, H, W), dtype=jnp.float32).astype(jnp.bfloat16)
    inputs = [img]

    (inp_out, res_list) = wrapper_forward(inputs)
    res = res_list[0]
    jax.block_until_ready((res["boxes"], res["labels"], res["scores"]))

    scale = 320.0 / min(H, W)
    h_out, w_out = int(math.floor(H * scale)), int(math.floor(W * scale))
    resized = bilinear_resize_x255(img, h_out, w_out)
    jax.block_until_ready(resized)
    assert resized.shape == (C, 320, 320)

    # Full-precision reference of interpolate(255*x); kernel uses bf16 MXU
    # operands with f32 accumulation (~1% worst-case on a 0-255 scale).
    img_f32 = img.astype(jnp.float32)
    wy_f = jnp.asarray(_interp_matrix_np(H, h_out), jnp.float32)
    wxt_f = jnp.asarray(_interp_matrix_np(W, w_out).T, jnp.float32)
    ref = 255.0 * jnp.einsum("oh,chw,wk->cok", wy_f, img_f32, wxt_f)
    assert jnp.allclose(resized.astype(jnp.float32), ref, rtol=3e-2, atol=0.5)

    # align_corners=True preserves corner pixels (up to bf16 rounding).
    assert jnp.allclose(resized[:, 0, 0].astype(jnp.float32),
                        img_f32[:, 0, 0] * 255.0, rtol=2e-2, atol=0.5)
    assert jnp.allclose(resized[:, -1, -1].astype(jnp.float32),
                        img_f32[:, -1, -1] * 255.0, rtol=2e-2, atol=0.5)

    # Secondary check: f32 input, ragged K chunking (W=200 with 128-wide chunks),
    # width-first stage order, padded-then-sliced output columns.
    img2 = jax.random.uniform(k_img2, (3, 24, 200), dtype=jnp.float32)
    r2 = bilinear_resize_x255(img2, 40, 96, k_target=128)
    jax.block_until_ready(r2)
    assert r2.shape == (3, 40, 96)
    wy2 = jnp.asarray(_interp_matrix_np(24, 40), jnp.float32)
    wxt2 = jnp.asarray(_interp_matrix_np(200, 96).T, jnp.float32)
    ref2 = 255.0 * jnp.einsum("oh,chw,wk->cok", wy2, img2, wxt2)
    assert jnp.allclose(r2.astype(jnp.float32), ref2, rtol=3e-2, atol=0.5)

    assert res["boxes"].shape == (1, 4)
    assert res["labels"].shape == (1,)
    assert int(res["labels"][0]) == 1

    print("KERNEL_OK")
</pallas_src>

<mosaic_0001>
module attributes {stable_mosaic.version = 11 : i64} {
  func.func @_resize_kernel(%arg0: i32, %arg1: i32, %arg2: memref<1x16x16xbf16, #tpu.memory_space<vmem>>, %arg3: memref<320x16xbf16, #tpu.memory_space<vmem>>, %arg4: memref<16x384xbf16, #tpu.memory_space<vmem>>, %arg5: memref<1x320x384xbf16, #tpu.memory_space<vmem>>, %arg6: memref<320x384xf32, #tpu.memory_space<vmem>>) attributes {dimension_semantics = [#tpu.dimension_semantics<parallel>, #tpu.dimension_semantics<arbitrary>], iteration_bounds = array<i64: 3, 1>, scalar_prefetch = 0 : i64, scratch_operands = 1 : i64, tpu.core_type = #tpu.core_type<tc>, window_params = [{transform_indices = @transform_0, window_bounds = array<i64: 1, 16, 16>}, {pipeline_mode = #tpu.pipeline_mode<synchronous>, transform_indices = @transform_1, window_bounds = array<i64: 320, 16>}, {pipeline_mode = #tpu.pipeline_mode<synchronous>, transform_indices = @transform_2, window_bounds = array<i64: 16, 384>}, {transform_indices = @transform_3, window_bounds = array<i64: 1, 320, 384>}]} {
    %c0_i32 = arith.constant 0 : i32
    %0 = arith.cmpi eq, %arg1, %c0_i32 : i32
    %1 = arith.extui %0 : i1 to i32
    %c0_i32_0 = arith.constant 0 : i32
    %2 = arith.cmpi ne, %1, %c0_i32_0 : i32
    scf.if %2 {
      %cst_14 = arith.constant 0.000000e+00 : f32
      %16 = vector.broadcast %cst_14 : f32 to vector<320x384xf32>
      %c0_15 = arith.constant 0 : index
      %c0_16 = arith.constant 0 : index
      %17 = vector.load %arg6[%c0_15, %c0_16] : memref<320x384xf32, #tpu.memory_space<vmem>>, vector<320x384xf32>
      tpu.vector_store %arg6[%c0_15, %c0_16], %16 {strides = array<i32>} : memref<320x384xf32, #tpu.memory_space<vmem>>, vector<320x384xf32>,
    } else {
    }
    %c0 = arith.constant 0 : index
    %c0_1 = arith.constant 0 : index
    %c0_2 = arith.constant 0 : index
    %3 = vector.load %arg2[%c0, %c0_1, %c0_2] : memref<1x16x16xbf16, #tpu.memory_space<vmem>>, vector<1x16x16xbf16>
    %4 = vector.shape_cast %3 : vector<1x16x16xbf16> to vector<16x16xbf16>
    %c0_3 = arith.constant 0 : index
    %c0_4 = arith.constant 0 : index
    %5 = vector.load %arg4[%c0_3, %c0_4] : memref<16x384xbf16, #tpu.memory_space<vmem>>, vector<16x384xbf16>
    %c0_5 = arith.constant 0 : index
    %c0_6 = arith.constant 0 : index
    %6 = vector.load %arg3[%c0_5, %c0_6] : memref<320x16xbf16, #tpu.memory_space<vmem>>, vector<320x16xbf16>
    %cst = arith.constant dense<0.000000e+00> : vector<320x16xf32>
    %7 = tpu.matmul %6, %4, %cst {dimension_numbers = #tpu.dot_dimension_numbers<[1], [0], [0], [1], [0, 0, 1, 1], [], []>} : vector<320x16xbf16>, vector<16x16xbf16>, vector<320x16xf32> -> vector<320x16xf32>
    %c0_7 = arith.constant 0 : index
    %c0_8 = arith.constant 0 : index
    %8 = vector.load %arg6[%c0_7, %c0_8] : memref<320x384xf32, #tpu.memory_space<vmem>>, vector<320x384xf32>
    %9 = arith.truncf %7 : vector<320x16xf32> to vector<320x16xbf16>
    %cst_9 = arith.constant dense<0.000000e+00> : vector<320x384xf32>
    %10 = tpu.matmul %9, %5, %cst_9 {dimension_numbers = #tpu.dot_dimension_numbers<[1], [0], [0], [1], [0, 0, 1, 1], [], []>} : vector<320x16xbf16>, vector<16x384xbf16>, vector<320x384xf32> -> vector<320x384xf32>
    %11 = arith.addf %8, %10 : vector<320x384xf32>
    %c0_10 = arith.constant 0 : index
    %c0_11 = arith.constant 0 : index
    %12 = vector.load %arg6[%c0_10, %c0_11] : memref<320x384xf32, #tpu.memory_space<vmem>>, vector<320x384xf32>
    tpu.vector_store %arg6[%c0_10, %c0_11], %11 {strides = array<i32>} : memref<320x384xf32, #tpu.memory_space<vmem>>, vector<320x384xf32>,
    %c0_i32_12 = arith.constant 0 : i32
    %13 = arith.cmpi eq, %arg1, %c0_i32_12 : i32
    %14 = arith.extui %13 : i1 to i32
    %c0_i32_13 = arith.constant 0 : i32
    %15 = arith.cmpi ne, %14, %c0_i32_13 : i32
    scf.if %15 {
      %c0_14 = arith.constant 0 : index
      %c0_15 = arith.constant 0 : index
      %16 = vector.load %arg6[%c0_14, %c0_15] : memref<320x384xf32, #tpu.memory_space<vmem>>, vector<320x384xf32>
      %17 = arith.truncf %16 : vector<320x384xf32> to vector<320x384xbf16>
      %c0_16 = arith.constant 0 : index
      %c0_17 = arith.constant 0 : index
      %c0_18 = arith.constant 0 : index
      %18 = vector.load %arg5[%c0_16, %c0_17, %c0_18] : memref<1x320x384xbf16, #tpu.memory_space<vmem>>, vector<1x320x384xbf16>
      %19 = vector.shape_cast %18 : vector<1x320x384xbf16> to vector<320x384xbf16>
      %20 = vector.shape_cast %17 : vector<320x384xbf16> to vector<1x320x384xbf16>
      tpu.vector_store %arg5[%c0_16, %c0_17, %c0_18], %20 {strides = array<i32>} : memref<1x320x384xbf16, #tpu.memory_space<vmem>>, vector<1x320x384xbf16>,
    } else {
    }
    return
  }
  func.func @transform_0(%arg0: i32, %arg1: i32) -> (i32, i32, i32) {
    %c0_i32 = arith.constant 0 : i32
    %c0_i32_0 = arith.constant 0 : i32
    return %arg0, %c0_i32, %arg1 : i32, i32, i32
  }
  func.func @transform_1(%arg0: i32, %arg1: i32) -> (i32, i32) {
    %c0_i32 = arith.constant 0 : i32
    %c0_i32_0 = arith.constant 0 : i32
    %c0_i32_1 = arith.constant 0 : i32
    return %c0_i32, %c0_i32_0 : i32, i32
  }
  func.func @transform_2(%arg0: i32, %arg1: i32) -> (i32, i32) {
    %c0_i32 = arith.constant 0 : i32
    %c0_i32_0 = arith.constant 0 : i32
    %c0_i32_1 = arith.constant 0 : i32
    return %c0_i32, %c0_i32_0 : i32, i32
  }
  func.func @transform_3(%arg0: i32, %arg1: i32) -> (i32, i32, i32) {
    %c0_i32 = arith.constant 0 : i32
    %c0_i32_0 = arith.constant 0 : i32
    %c0_i32_1 = arith.constant 0 : i32
    return %arg0, %c0_i32, %c0_i32_0 : i32, i32, i32
  }
}

</mosaic_0001>

<llo_original>
// kernel: tpu_custom_call.1
$region0: #{tpu_custom_call.1}
  #allocation0 [shape = 'u32[]', space=smem, size = 0x4, offset = 0x4, fixed_abs, tag = 'smem constant byte address 0x4 - core index']
  #allocation1 [shape = 'u32[144,128]{1,0:T(1,128)}', space=vmem, size = 0x12000, scoped, tag = 'internal scratch']
  #allocation2 [shape = 'f32[320,384]{1,0:T(8,128)}', space=vmem, size = 0x78000, scoped, tag = 'scratch operand']
  %s0 = inlined_call_operand.vmem [shape: bf16[3,16,16], index: 0, kind: input, shape index: {}]
  %s1 = inlined_call_operand.vmem [shape: bf16[320,16], index: 1, kind: input, shape index: {}]
  %s2 = inlined_call_operand.vmem [shape: bf16[16,384], index: 2, kind: input, shape index: {}]
  %s3 = inlined_call_operand.hbm [shape: bf16[3,320,384], index: 3, kind: output, shape index: {}]
  %s4 = sld [smem:[#allocation0]]
  $region53: #{tpu_custom_call.1} parent=0
    _
  %s6 = ssub.s32 1, %s4
  %s7 = scalar_select 0, %s6, %s4
  $region1: #{tpu_custom_call.1} parent=0
    #allocation3 [shape = 'u8[491520]{0}', space=vmem, size = 0x78000, scoped, tag = 'output window, operand 0']
    #allocation4 [shape = 's32[2]{0}', space=sflag, size = 0x8, scoped, tag = 'scoped memory for tpu_custom_call.1']
    %8 = vsyncpa [#allocation4], 0
    %s9 = scalar_lea.sflag [#allocation4], 1
    %10 = vsyncpa %s9, 0
    loop: start=0, step=1, limit=5
    $region2: #{tpu_custom_call.1} parent=1 // loop_pre_header
      _
    $region3: #{tpu_custom_call.1} parent=1 // loop_header
      %s12 = sphi 0, %s16
      %p13 = scmp.ge.s32.totalorder %s12, 5
      %s19 = sphi 0, %s31
      %s20 = sphi 0, %s27
      %s21 = sphi 0, %s19
      %s22 = sphi 0, %s20
      %s23 = sphi 0, %s21
      %s24 = sphi 0, %s22
      %s36 = sphi 0, %s38
      %s39 = sphi 0, %s36
      %s40 = sphi 0, %s39
      %s56 = sphi 0, %s40
      %s60 = sphi 0, %s60
      %s62 = sphi 0, %s60
      %s63 = sphi 0, %s62
      %s77 = sphi 0, %s63
      %s81 = sphi 0, %s81
      %s83 = sphi 0, %s81
      %s84 = sphi 0, %s83
      %s98 = sphi 0, %s84
      %s104 = sphi 0, %s106
      %s107 = sphi 0, %s104
      %s108 = sphi 0, %s107
      %s124 = sphi 0, %s108
    $region4: #{tpu_custom_call.1} parent=1 // loop_header_branch
      %15 = sbr.rel (%p13) target = $region8
    $region5: #{tpu_custom_call.1} parent=1 // loop_body
      %s17 = ssub.s32 %s12, 1
      %s18 = ssub.s32 %s12, 2
      %s25 = sadd.s32 1, %s20
      %p26 = scmp.ge.s32.totalorder %s25, 1
      %s27 = scalar_select %p26, 0, %s25
      %s28 = sadd.s32 1, %s19
      %s29 = scalar_select %p26, %s28, %s19
      %p30 = scmp.ge.s32.totalorder %s29, 3
      %s31 = scalar_select %p30, 0, %s29
      %s32 = ssub.s32 %s19, %s31
      %s33 = ssub.s32 %s20, %s27
      %s34 = sor.u32 %s32, %s33
      %p35 = scmp.eq.s32.totalorder %s34, 0
      %s37 = sadd.s32 %s36, 1
      %s38 = scalar_select %p35, %s36, %s37
      %p41 = pneg %p35
      %p42 = scmp.eq.s32.totalorder %s12, 2
      %p43 = por %p41, %p42
      %p44 = scmp.ne.s32.totalorder %s36, %s39
      %p45 = scmp.eq.s32.totalorder %s12, 0
      %p46 = por %p44, %p45
      %p47 = scmp.ne.s32.totalorder %s36, %s39
      %p48 = scmp.eq.s32.totalorder %s17, 2
      %p49 = por %p47, %p48
      %p50 = scmp.ne.s32.totalorder %s39, %s40
      %p51 = scmp.eq.s32.totalorder %s17, 0
      %p52 = por %p50, %p51
      %p53 = scmp.ne.s32.totalorder %s39, %s40
      %p54 = scmp.eq.s32.totalorder %s18, 2
      %p55 = por %p53, %p54
      %p57 = scmp.ne.s32.totalorder %s40, %s56
      %p58 = scmp.eq.s32.totalorder %s18, 0
      %p59 = por %p57, %p58
      %s61 = sadd.s32 %s60, 1
      %p64 = scmp.eq.s32.totalorder %s12, 2
      %p65 = scmp.ne.s32.totalorder %s60, %s62
      %p66 = scmp.eq.s32.totalorder %s12, 0
      %p67 = por %p65, %p66
      %p68 = scmp.ne.s32.totalorder %s60, %s62
      %p69 = scmp.eq.s32.totalorder %s17, 2
      %p70 = por %p68, %p69
      %p71 = scmp.ne.s32.totalorder %s62, %s63
      %p72 = scmp.eq.s32.totalorder %s17, 0
      %p73 = por %p71, %p72
      %p74 = scmp.ne.s32.totalorder %s62, %s63
      %p75 = scmp.eq.s32.totalorder %s18, 2
      %p76 = por %p74, %p75
      %p78 = scmp.ne.s32.totalorder %s63, %s77
      %p79 = scmp.eq.s32.totalorder %s18, 0
      %p80 = por %p78, %p79
      %s82 = sadd.s32 %s81, 1
      %p85 = scmp.eq.s32.totalorder %s12, 2
      %p86 = scmp.ne.s32.totalorder %s81, %s83
      %p87 = scmp.eq.s32.totalorder %s12, 0
      %p88 = por %p86, %p87
      %p89 = scmp.ne.s32.totalorder %s81, %s83
      %p90 = scmp.eq.s32.totalorder %s17, 2
      %p91 = por %p89, %p90
      %p92 = scmp.ne.s32.totalorder %s83, %s84
      %p93 = scmp.eq.s32.totalorder %s17, 0
      %p94 = por %p92, %p93
      %p95 = scmp.ne.s32.totalorder %s83, %s84
      %p96 = scmp.eq.s32.totalorder %s18, 2
      %p97 = por %p95, %p96
      %p99 = scmp.ne.s32.totalorder %s84, %s98
      %p100 = scmp.eq.s32.totalorder %s18, 0
      %p101 = por %p99, %p100
      %s102 = ssub.s32 %s19, %s31
      %p103 = scmp.eq.s32.totalorder %s102, 0
      %s105 = sadd.s32 %s104, 1
      %s106 = scalar_select %p103, %s104, %s105
      %p109 = pneg %p103
      %p110 = scmp.eq.s32.totalorder %s12, 2
      %p111 = por %p109, %p110
      %p112 = scmp.ne.s32.totalorder %s104, %s107
      %p113 = scmp.eq.s32.totalorder %s12, 0
      %p114 = por %p112, %p113
      %p115 = scmp.ne.s32.totalorder %s104, %s107
      %p116 = scmp.eq.s32.totalorder %s17, 2
      %p117 = por %p115, %p116
      %p118 = scmp.ne.s32.totalorder %s107, %s108
      %p119 = scmp.eq.s32.totalorder %s17, 0
      %p120 = por %p118, %p119
      %p121 = scmp.ne.s32.totalorder %s107, %s108
      %p122 = scmp.eq.s32.totalorder %s18, 2
      %p123 = por %p121, %p122
      %p125 = scmp.ne.s32.totalorder %s108, %s124
      %p126 = scmp.eq.s32.totalorder %s18, 0
      %p127 = por %p125, %p126
      %p128 = scmp.le.s32.totalorder 1, %s12
      %p129 = scmp.lt.s32.totalorder %s12, 4
      %p130 = pnand %p128, %p129
      %p131 = pneg %p130
      // Predicated region
      $region9: #{tpu_custom_call.1} parent=5 // pred_check
        _
      $region10: #{tpu_custom_call.1} parent=5 // pred_check_branch
        %133 = sbr.rel (%p130) target = $region12
      $region11: #{tpu_custom_call.1} parent=5 // pred_region
        %s134 = ssub.s32 %s12, 1
        // Predicated region
        $region13: #{tpu_custom_call.1} parent=11 // pred_check
          %p135 = pneg %p73
        $region14: #{tpu_custom_call.1} parent=11 // pred_check_branch
          %137 = sbr.rel (%p135) target = $region16
        $region15: #{tpu_custom_call.1} parent=11 // pred_region
          _
        $region16: #{tpu_custom_call.1} parent=11 // pred_fallthru
          _
        // Predicated region
        $region17: #{tpu_custom_call.1} parent=11 // pred_check
          %p138 = pneg %p94
        $region18: #{tpu_custom_call.1} parent=11 // pred_check_branch
          %140 = sbr.rel (%p138) target = $region20
        $region19: #{tpu_custom_call.1} parent=11 // pred_region
          _
        $region20: #{tpu_custom_call.1} parent=11 // pred_fallthru
          _
      $region12: #{tpu_custom_call.1} parent=5 // pred_fallthru
        _
      %p141 = scmp.lt.s32.totalorder %s12, 3
      // Predicated region
      $region21: #{tpu_custom_call.1} parent=5 // pred_check
        %p142 = pneg %p141
      $region22: #{tpu_custom_call.1} parent=5 // pred_check_branch
        %144 = sbr.rel (%p142) target = $region24
      $region23: #{tpu_custom_call.1} parent=5 // pred_region
        // Predicated region
        $region25: #{tpu_custom_call.1} parent=23 // pred_check
          %p145 = pneg %p46
        $region26: #{tpu_custom_call.1} parent=23 // pred_check_branch
          %147 = sbr.rel (%p145) target = $region28
        $region27: #{tpu_custom_call.1} parent=23 // pred_region
          %p148 = scmp.lt.s32.totalorder %s19, 2
          %s149 = scalar_select %p148, %s19, 2
          %p150 = scmp.lt.s32.totalorder %s20, 0
          %s151 = scalar_select %p150, %s20, 0
          %s152 = smul.addr %s149, 2
          %s153 = sadd.s32 %s151, %s152
          %s154 = smul.addr %s153, 4
          %s155 = scalar_lea.vmem %s0, %s154
        $region28: #{tpu_custom_call.1} parent=23 // pred_fallthru
          _
      $region24: #{tpu_custom_call.1} parent=5 // pred_fallthru
        _
      %p156 = scmp.le.s32.totalorder 1, %s12
      %p157 = scmp.lt.s32.totalorder %s12, 4
      %p158 = pnand %p156, %p157
      %p159 = pneg %p158
      // Predicated region
      $region29: #{tpu_custom_call.1} parent=5 // pred_check
        _
      $region30: #{tpu_custom_call.1} parent=5 // pred_check_branch
        %161 = sbr.rel (%p158) target = $region32
      $region31: #{tpu_custom_call.1} parent=5 // pred_region
        %s162 = ssub.s32 %s12, 1
        %p163 = scmp.lt.s32.totalorder %s21, 2
        %s164 = scalar_select %p163, %s21, 2
        %p165 = scmp.lt.s32.totalorder %s22, 0
        %s166 = scalar_select %p165, %s22, 0
        %s167 = smul.addr %s164, 2
        %s168 = sadd.s32 %s166, %s167
        %s169 = smul.addr %s168, 4
        %s170 = scalar_lea.vmem %s0, %s169
        %p171 = pneg %p52
        %p172 = pneg %p49
        %p173 = pneg %p73
        %p174 = pneg %p70
        %p175 = pneg %p94
        %p176 = pneg %p91
        %p177 = pneg %p120
        %p178 = pneg %p117
        %s179 = sand.u32 %s107, 1
        %s180 = scalar_lea.sflag [#allocation4], %s179
        %s181 = sand.u32 %s107, 1
        %s182 = smul.addr %s181, 480
        %s183 = scalar_lea.vmem [#allocation3], %s182
        %p184 = scmp.lt.s32.totalorder %s21, 2
        %s185 = scalar_select %p184, %s21, 2
        %p186 = scmp.lt.s32.totalorder %s22, 0
        %s187 = scalar_select %p186, %s22, 0
        %s188 = smul.addr %s185, 2
        %s189 = sadd.s32 %s187, %s188
        %s190 = smul.addr %s189, 4
        %s191 = scalar_lea.vmem %s0, %s190
        %p193 = scmp.eq.s32.totalorder %s22, 0
        // Predicated region
        $region33: #{tpu_custom_call.1} parent=31 // pred_check
          %p194 = pneg %p193
        $region34: #{tpu_custom_call.1} parent=31 // pred_check_branch
          %196 = sbr.rel (%p194) target = $region36
        $region35: #{tpu_custom_call.1} parent=31 // pred_region
          %197 = vst [vmem:[#allocation2] sm:$0xff] 0.0
          %198 = vst [vmem:[#allocation2 + $0x8] sm:$0xff] 0.0
          %199 = vst [vmem:[#allocation2 + $0x10] sm:$0xff] 0.0
          %200 = vst [vmem:[#allocation2 + $0x18] sm:$0xff] 0.0
          %201 = vst [vmem:[#allocation2 + $0x20] sm:$0xff] 0.0
          %202 = vst [vmem:[#allocation2 + $0x28] sm:$0xff] 0.0
          %203 = vst [vmem:[#allocation2 + $0x30] sm:$0xff] 0.0
          %204 = vst [vmem:[#allocation2 + $0x38] sm:$0xff] 0.0
          %205 = vst [vmem:[#allocation2 + $0x40] sm:$0xff] 0.0
          %206 = vst [vmem:[#allocation2 + $0x48] sm:$0xff] 0.0
          %207 = vst [vmem:[#allocation2 + $0x50] sm:$0xff] 0.0
          %208 = vst [vmem:[#allocation2 + $0x58] sm:$0xff] 0.0
          %209 = vst [vmem:[#allocation2 + $0x60] sm:$0xff] 0.0
          %210 = vst [vmem:[#allocation2 + $0x68] sm:$0xff] 0.0
          %211 = vst [vmem:[#allocation2 + $0x70] sm:$0xff] 0.0
          %212 = vst [vmem:[#allocation2 + $0x78] sm:$0xff] 0.0
          %213 = vst [vmem:[#allocation2 + $0x80] sm:$0xff] 0.0
          %214 = vst [vmem:[#allocation2 + $0x88] sm:$0xff] 0.0
          %215 = vst [vmem:[#allocation2 + $0x90] sm:$0xff] 0.0
          %216 = vst [vmem:[#allocation2 + $0x98] sm:$0xff] 0.0
          %217 = vst [vmem:[#allocation2 + $0xa0] sm:$0xff] 0.0
          %218 = vst [vmem:[#allocation2 + $0xa8] sm:$0xff] 0.0
          %219 = vst [vmem:[#allocation2 + $0xb0] sm:$0xff] 0.0
          %220 = vst [vmem:[#allocation2 + $0xb8] sm:$0xff] 0.0
          %221 = vst [vmem:[#allocation2 + $0xc0] sm:$0xff] 0.0
          %222 = vst [vmem:[#allocation2 + $0xc8] sm:$0xff] 0.0
          %223 = vst [vmem:[#allocation2 + $0xd0] sm:$0xff] 0.0
          %224 = vst [vmem:[#allocation2 + $0xd8] sm:$0xff] 0.0
          %225 = vst [vmem:[#allocation2 + $0xe0] sm:$0xff] 0.0
          %226 = vst [vmem:[#allocation2 + $0xe8] sm:$0xff] 0.0
          %227 = vst [vmem:[#allocation2 + $0xf0] sm:$0xff] 0.0
          %228 = vst [vmem:[#allocation2 + $0xf8] sm:$0xff] 0.0
          %229 = vst [vmem:[#allocation2 + $0x100] sm:$0xff] 0.0
          %230 = vst [vmem:[#allocation2 + $0x108] sm:$0xff] 0.0
          %231 = vst [vmem:[#allocation2 + $0x110] sm:$0xff] 0.0
          %232 = vst [vmem:[#allocation2 + $0x118] sm:$0xff] 0.0
          %233 = vst [vmem:[#allocation2 + $0x120] sm:$0xff] 0.0
          %234 = vst [vmem:[#allocation2 + $0x128] sm:$0xff] 0.0
          %235 = vst [vmem:[#allocation2 + $0x130] sm:$0xff] 0.0
          %236 = vst [vmem:[#allocation2 + $0x138] sm:$0xff] 0.0
          %237 = vst [vmem:[#allocation2 + $0x140] sm:$0xff] 0.0
          %238 = vst [vmem:[#allocation2 + $0x148] sm:$0xff] 0.0
          %239 = vst [vmem:[#allocation2 + $0x150] sm:$0xff] 0.0
          %240 = vst [vmem:[#allocation2 + $0x158] sm:$0xff] 0.0
          %241 = vst [vmem:[#allocation2 + $0x160] sm:$0xff] 0.0
          %242 = vst [vmem:[#allocation2 + $0x168] sm:$0xff] 0.0
          %243 = vst [vmem:[#allocation2 + $0x170] sm:$0xff] 0.0
          %244 = vst [vmem:[#allocation2 + $0x178] sm:$0xff] 0.0
          %245 = vst [vmem:[#allocation2 + $0x180] sm:$0xff] 0.0
          %246 = vst [vmem:[#allocation2 + $0x188] sm:$0xff] 0.0
          %247 = vst [vmem:[#allocation2 + $0x190] sm:$0xff] 0.0
          %248 = vst [vmem:[#allocation2 + $0x198] sm:$0xff] 0.0
          %249 = vst [vmem:[#allocation2 + $0x1a0] sm:$0xff] 0.0
          %250 = vst [vmem:[#allocation2 + $0x1a8] sm:$0xff] 0.0
          %251 = vst [vmem:[#allocation2 + $0x1b0] sm:$0xff] 0.0
          %252 = vst [vmem:[#allocation2 + $0x1b8] sm:$0xff] 0.0
          %253 = vst [vmem:[#allocation2 + $0x1c0] sm:$0xff] 0.0
          %254 = vst [vmem:[#allocation2 + $0x1c8] sm:$0xff] 0.0
          %255 = vst [vmem:[#allocation2 + $0x1d0] sm:$0xff] 0.0
          %256 = vst [vmem:[#allocation2 + $0x1d8] sm:$0xff] 0.0
          %257 = vst [vmem:[#allocation2 + $0x1e0] sm:$0xff] 0.0
          %258 = vst [vmem:[#allocation2 + $0x1e8] sm:$0xff] 0.0
          %259 = vst [vmem:[#allocation2 + $0x1f0] sm:$0xff] 0.0
          %260 = vst [vmem:[#allocation2 + $0x1f8] sm:$0xff] 0.0
          %261 = vst [vmem:[#allocation2 + $0x200] sm:$0xff] 0.0
          %262 = vst [vmem:[#allocation2 + $0x208] sm:$0xff] 0.0
          %263 = vst [vmem:[#allocation2 + $0x210] sm:$0xff] 0.0
          %264 = vst [vmem:[#allocation2 + $0x218] sm:$0xff] 0.0
          %265 = vst [vmem:[#allocation2 + $0x220] sm:$0xff] 0.0
          %266 = vst [vmem:[#allocation2 + $0x228] sm:$0xff] 0.0
          %267 = vst [vmem:[#allocation2 + $0x230] sm:$0xff] 0.0
          %268 = vst [vmem:[#allocation2 + $0x238] sm:$0xff] 0.0
          %269 = vst [vmem:[#allocation2 + $0x240] sm:$0xff] 0.0
          %270 = vst [vmem:[#allocation2 + $0x248] sm:$0xff] 0.0
          %271 = vst [vmem:[#allocation2 + $0x250] sm:$0xff] 0.0
          %272 = vst [vmem:[#allocation2 + $0x258] sm:$0xff] 0.0
          %273 = vst [vmem:[#allocation2 + $0x260] sm:$0xff] 0.0
          %274 = vst [vmem:[#allocation2 + $0x268] sm:$0xff] 0.0
          %275 = vst [vmem:[#allocation2 + $0x270] sm:$0xff] 0.0
          %276 = vst [vmem:[#allocation2 + $0x278] sm:$0xff] 0.0
          %277 = vst [vmem:[#allocation2 + $0x280] sm:$0xff] 0.0
          %278 = vst [vmem:[#allocation2 + $0x288] sm:$0xff] 0.0
          %279 = vst [vmem:[#allocation2 + $0x290] sm:$0xff] 0.0
          %280 = vst [vmem:[#allocation2 + $0x298] sm:$0xff] 0.0
          %281 = vst [vmem:[#allocation2 + $0x2a0] sm:$0xff] 0.0
          %282 = vst [vmem:[#allocation2 + $0x2a8] sm:$0xff] 0.0
          %283 = vst [vmem:[#allocation2 + $0x2b0] sm:$0xff] 0.0
          %284 = vst [vmem:[#allocation2 + $0x2b8] sm:$0xff] 0.0
          %285 = vst [vmem:[#allocation2 + $0x2c0] sm:$0xff] 0.0
          %286 = vst [vmem:[#allocation2 + $0x2c8] sm:$0xff] 0.0
          %287 = vst [vmem:[#allocation2 + $0x2d0] sm:$0xff] 0.0
          %288 = vst [vmem:[#allocation2 + $0x2d8] sm:$0xff] 0.0
          %289 = vst [vmem:[#allocation2 + $0x2e0] sm:$0xff] 0.0
          %290 = vst [vmem:[#allocation2 + $0x2e8] sm:$0xff] 0.0
          %291 = vst [vmem:[#allocation2 + $0x2f0] sm:$0xff] 0.0
          %292 = vst [vmem:[#allocation2 + $0x2f8] sm:$0xff] 0.0
          %293 = vst [vmem:[#allocation2 + $0x300] sm:$0xff] 0.0
          %294 = vst [vmem:[#allocation2 + $0x308] sm:$0xff] 0.0
          %295 = vst [vmem:[#allocation2 + $0x310] sm:$0xff] 0.0
          %296 = vst [vmem:[#allocation2 + $0x318] sm:$0xff] 0.0
          %297 = vst [vmem:[#allocation2 + $0x320] sm:$0xff] 0.0
          %298 = vst [vmem:[#allocation2 + $0x328] sm:$0xff] 0.0
          %299 = vst [vmem:[#allocation2 + $0x330] sm:$0xff] 0.0
          %300 = vst [vmem:[#allocation2 + $0x338] sm:$0xff] 0.0
          %301 = vst [vmem:[#allocation2 + $0x340] sm:$0xff] 0.0
          %302 = vst [vmem:[#allocation2 + $0x348] sm:$0xff] 0.0
          %303 = vst [vmem:[#allocation2 + $0x350] sm:$0xff] 0.0
          %304 = vst [vmem:[#allocation2 + $0x358] sm:$0xff] 0.0
          %305 = vst [vmem:[#allocation2 + $0x360] sm:$0xff] 0.0
          %306 = vst [vmem:[#allocation2 + $0x368] sm:$0xff] 0.0
          %307 = vst [vmem:[#allocation2 + $0x370] sm:$0xff] 0.0
          %308 = vst [vmem:[#allocation2 + $0x378] sm:$0xff] 0.0
          %309 = vst [vmem:[#allocation2 + $0x380] sm:$0xff] 0.0
          %310 = vst [vmem:[#allocation2 + $0x388] sm:$0xff] 0.0
          %311 = vst [vmem:[#allocation2 + $0x390] sm:$0xff] 0.0
          %312 = vst [vmem:[#allocation2 + $0x398] sm:$0xff] 0.0
          %313 = vst [vmem:[#allocation2 + $0x3a0] sm:$0xff] 0.0
          %314 = vst [vmem:[#allocation2 + $0x3a8] sm:$0xff] 0.0
          %315 = vst [vmem:[#allocation2 + $0x3b0] sm:$0xff] 0.0
          %316 = vst [vmem:[#allocation2 + $0x3b8] sm:$0xff] 0.0
        $region36: #{tpu_custom_call.1} parent=31 // pred_fallthru
          _
        %v317 = vld [vmem:[%s191] sm:$0xf]
        %v318 = vld [vmem:[%s191 + $0x4] sm:$0xf]
        %v319 = vld [vmem:[%s2] sm:$0xff]
        %v320 = vld [vmem:[%s2 + $0x8] sm:$0xf]
        %v321 = vld [vmem:[%s2 + $0xc] sm:$0xff]
        %v322 = vld [vmem:[%s2 + $0x14] sm:$0xf]
        %v323 = vld [vmem:[%s1] sm:$0xf]
        %v324 = vld [vmem:[%s1 + $0x4] sm:$0xf]
        %v325 = vld [vmem:[%s1 + $0x8] sm:$0xf]
        %v326 = vld [vmem:[%s1 + $0xc] sm:$0xf]
        %v327 = vld [vmem:[%s1 + $0x10] sm:$0xf]
        %v328 = vld [vmem:[%s1 + $0x14] sm:$0xf]
        %v329 = vld [vmem:[%s1 + $0x18] sm:$0xf]
        %v330 = vld [vmem:[%s1 + $0x1c] sm:$0xf]
        %v331 = vld [vmem:[%s1 + $0x20] sm:$0xf]
        %v332 = vld [vmem:[%s1 + $0x24] sm:$0xf]
        %v333 = vld [vmem:[%s1 + $0x28] sm:$0xf]
        %v334 = vld [vmem:[%s1 + $0x2c] sm:$0xf]
        %v335 = vld [vmem:[%s1 + $0x30] sm:$0xf]
        %v336 = vld [vmem:[%s1 + $0x34] sm:$0xf]
        %v337 = vld [vmem:[%s1 + $0x38] sm:$0xf]
        %v338 = vld [vmem:[%s1 + $0x3c] sm:$0xf]
        %v339 = vld [vmem:[%s1 + $0x40] sm:$0xf]
        %v340 = vld [vmem:[%s1 + $0x44] sm:$0xf]
        %v341 = vld [vmem:[%s1 + $0x48] sm:$0xf]
        %v342 = vld [vmem:[%s1 + $0x4c] sm:$0xf]
        %v343 = vld [vmem:[%s1 + $0x50] sm:$0xf]
        %v344 = vld [vmem:[%s1 + $0x54] sm:$0xf]
        %v345 = vld [vmem:[%s1 + $0x58] sm:$0xf]
        %v346 = vld [vmem:[%s1 + $0x5c] sm:$0xf]
        %v347 = vld [vmem:[%s1 + $0x60] sm:$0xf]
        %v348 = vld [vmem:[%s1 + $0x64] sm:$0xf]
        %v349 = vld [vmem:[%s1 + $0x68] sm:$0xf]
        %v350 = vld [vmem:[%s1 + $0x6c] sm:$0xf]
        %v351 = vld [vmem:[%s1 + $0x70] sm:$0xf]
        %v352 = vld [vmem:[%s1 + $0x74] sm:$0xf]
        %v353 = vld [vmem:[%s1 + $0x78] sm:$0xf]
        %v354 = vld [vmem:[%s1 + $0x7c] sm:$0xf]
        %v355 = vld [vmem:[%s1 + $0x80] sm:$0xf]
        %v356 = vld [vmem:[%s1 + $0x84] sm:$0xf]
        %v357 = vld [vmem:[%s1 + $0x88] sm:$0xf]
        %v358 = vld [vmem:[%s1 + $0x8c] sm:$0xf]
        %v359 = vld [vmem:[%s1 + $0x90] sm:$0xf]
        %v360 = vld [vmem:[%s1 + $0x94] sm:$0xf]
        %v361 = vld [vmem:[%s1 + $0x98] sm:$0xf]
        %v362 = vld [vmem:[%s1 + $0x9c] sm:$0xf]
        %v403 = vunpack.c.l.b16 %v323
        %v404 = vunpack.c.l.b16 %v324
        %v405 = vunpack.c.l.b16 %v325
        %v406 = vunpack.c.l.b16 %v326
        %v407 = vunpack.c.l.b16 %v327
        %v408 = vunpack.c.l.b16 %v328
        %v409 = vunpack.c.l.b16 %v329
        %v410 = vunpack.c.l.b16 %v330
        %v411 = vunpack.c.l.b16 %v331
        %v412 = vunpack.c.l.b16 %v332
        %v413 = vunpack.c.l.b16 %v333
        %v414 = vunpack.c.l.b16 %v334
        %v415 = vunpack.c.l.b16 %v335
        %v416 = vunpack.c.l.b16 %v336
        %v417 = vunpack.c.l.b16 %v337
        %v418 = vunpack.c.l.b16 %v338
        %v419 = vunpack.c.l.b16 %v339
        %v420 = vunpack.c.l.b16 %v340
        %v421 = vunpack.c.l.b16 %v341
        %v422 = vunpack.c.l.b16 %v342
        %v423 = vunpack.c.l.b16 %v343
        %v424 = vunpack.c.l.b16 %v344
        %v425 = vunpack.c.l.b16 %v345
        %v426 = vunpack.c.l.b16 %v346
        %v427 = vunpack.c.l.b16 %v347
        %v428 = vunpack.c.l.b16 %v348
        %v429 = vunpack.c.l.b16 %v349
        %v430 = vunpack.c.l.b16 %v350
        %v431 = vunpack.c.l.b16 %v351
        %v432 = vunpack.c.l.b16 %v352
        %v433 = vunpack.c.l.b16 %v353
        %v434 = vunpack.c.l.b16 %v354
        %v435 = vunpack.c.l.b16 %v355
        %v436 = vunpack.c.l.b16 %v356
        %v437 = vunpack.c.l.b16 %v357
        %v438 = vunpack.c.l.b16 %v358
        %v439 = vunpack.c.l.b16 %v359
        %v440 = vunpack.c.l.b16 %v360
        %v441 = vunpack.c.l.b16 %v361
        %v442 = vunpack.c.l.b16 %v362
        %v443 = vpack.c.b16 %v404, %v403
        %v444 = vpack.c.b16 %v406, %v405
        %v445 = vpack.c.b16 %v408, %v407
        %v446 = vpack.c.b16 %v410, %v409
        %v447 = vpack.c.b16 %v412, %v411
        %v448 = vpack.c.b16 %v414, %v413
        %v449 = vpack.c.b16 %v416, %v415
        %v450 = vpack.c.b16 %v418, %v417
        %v451 = vpack.c.b16 %v420, %v419
        %v452 = vpack.c.b16 %v422, %v421
        %v453 = vpack.c.b16 %v424, %v423
        %v454 = vpack.c.b16 %v426, %v425
        %v455 = vpack.c.b16 %v428, %v427
        %v456 = vpack.c.b16 %v430, %v429
        %v457 = vpack.c.b16 %v432, %v431
        %v458 = vpack.c.b16 %v434, %v433
        %v459 = vpack.c.b16 %v436, %v435
        %v460 = vpack.c.b16 %v438, %v437
        %v461 = vpack.c.b16 %v440, %v439
        %v462 = vpack.c.b16 %v442, %v441
        %v465 = vunpack.c.l.b16 %v317
        %v466 = vunpack.c.l.b16 %v318
        %v467 = vpack.c.b16 %v466, %v465
        %vm469 = vcmask 130048
        %v471 = vsel %vm469, %v443, 0
        %v474 = vsel %vm469, %v444, 0
        %v477 = vsel %vm469, %v445, 0
        %v480 = vsel %vm469, %v446, 0
        %v483 = vsel %vm469, %v447, 0
        %v486 = vsel %vm469, %v448, 0
        %v489 = vsel %vm469, %v449, 0
        %v492 = vsel %vm469, %v450, 0
        %v495 = vsel %vm469, %v451, 0
        %v498 = vsel %vm469, %v452, 0
        %v501 = vsel %vm469, %v453, 0
        %v504 = vsel %vm469, %v454, 0
        %v507 = vsel %vm469, %v455, 0
        %v510 = vsel %vm469, %v456, 0
        %v513 = vsel %vm469, %v457, 0
        %v516 = vsel %vm469, %v458, 0
        %v519 = vsel %vm469, %v459, 0
        %v522 = vsel %vm469, %v460, 0
        %v525 = vsel %vm469, %v461, 0
        %v528 = vsel %vm469, %v462, 0
        %530 = vmatprep.subr.bf16.mxu0 0
        %531 = vmatpush1.bf16.msra.mxu0 %v467
        %532 = vmatprep.subr.bf16.mxu0 0
        %533 = vmatpush1.bf16.msra.mxu0 0
        %534 = vmatprep.subr.bf16.mxu0 0
        %535 = vmatpush1.bf16.msra.mxu0 0
        %536 = vmatprep.subr.bf16.mxu0 0
        %537 = vmatpush1.bf16.msra.mxu0 0
        %538 = vmatprep.subr.bf16.mxu0 0
        %539 = vmatpush1.bf16.msra.mxu0 0
        %540 = vmatprep.subr.bf16.mxu0 0
        %541 = vmatpush1.bf16.msra.mxu0 0
        %542 = vmatprep.subr.bf16.mxu0 0
        %543 = vmatpush1.bf16.msra.mxu0 0
        %544 = vmatprep.subr.bf16.mxu0 0
        %545 = vmatpush1.bf16.msra.mxu0 0
        %546 = vmatprep.subr.bf16.mxu0 0
        %547 = vmatpush1.bf16.msra.mxu0 0
        %548 = vmatprep.subr.bf16.mxu0 0
        %549 = vmatpush1.bf16.msra.mxu0 0
        %550 = vmatprep.subr.bf16.mxu0 0
        %551 = vmatpush1.bf16.msra.mxu0 0
        %552 = vmatprep.subr.bf16.mxu0 0
        %553 = vmatpush1.bf16.msra.mxu0 0
        %554 = vmatprep.subr.bf16.mxu0 0
        %555 = vmatpush1.bf16.msra.mxu0 0
        %556 = vmatprep.subr.bf16.mxu0 0
        %557 = vmatpush1.bf16.msra.mxu0 0
        %558 = vmatprep.subr.bf16.mxu0 0
        %559 = vmatpush1.bf16.msra.mxu0 0
        %560 = vmatprep.subr.bf16.mxu0 0
        %561 = vmatpush1.bf16.msra.mxu0 0
        %562 = vmatprep.mubr.bf16.mxu0 0
        %563 = vmatmul.mubr.bf16.gmra.mrb[0].mxu0 %v471
        %v564 = vpop.f32.mrb[0].mxu0
        %v565 = vadd.f32 0.0, %v564
        %v566 = vpop.f32.mrb[0].mxu0
        %v567 = vpop.f32.mrb[0].mxu0
        %v568 = vadd.f32 0.0, %v567
        %v569 = vpop.f32.mrb[0].mxu0
        %570 = vmatprep.mubr.bf16.mxu0 0
        %571 = vmatmul.mubr.bf16.gmra.mrb[0].mxu0 %v474
        %v572 = vpop.f32.mrb[0].mxu0
        %v573 = vadd.f32 0.0, %v572
        %v574 = vpop.f32.mrb[0].mxu0
        %v575 = vpop.f32.mrb[0].mxu0
        %v576 = vadd.f32 0.0, %v575
        %v577 = vpop.f32.mrb[0].mxu0
        %578 = vmatprep.mubr.bf16.mxu0 0
        %579 = vmatmul.mubr.bf16.gmra.mrb[0].mxu0 %v477
        %v580 = vpop.f32.mrb[0].mxu0
        %v581 = vadd.f32 0.0, %v580
        %v582 = vpop.f32.mrb[0].mxu0
        %v583 = vpop.f32.mrb[0].mxu0
        %v584 = vadd.f32 0.0, %v583
        %v585 = vpop.f32.mrb[0].mxu0
        %586 = vmatprep.mubr.bf16.mxu0 0
        %587 = vmatmul.mubr.bf16.gmra.mrb[0].mxu0 %v480
        %v588 = vpop.f32.mrb[0].mxu0
        %v589 = vadd.f32 0.0, %v588
        %v590 = vpop.f32.mrb[0].mxu0
        %v591 = vpop.f32.mrb[0].mxu0
        %v592 = vadd.f32 0.0, %v591
        %v593 = vpop.f32.mrb[0].mxu0
        %594 = vmatprep.mubr.bf16.mxu0 0
        %595 = vmatmul.mubr.bf16.gmra.mrb[0].mxu0 %v483
        %v596 = vpop.f32.mrb[0].mxu0
        %v597 = vadd.f32 0.0, %v596
        %v598 = vpop.f32.mrb[0].mxu0
        %v599 = vpop.f32.mrb[0].mxu0
        %v600 = vadd.f32 0.0, %v599
        %v601 = vpop.f32.mrb[0].mxu0
        %602 = vmatprep.mubr.bf16.mxu0 0
        %603 = vmatmul.mubr.bf16.gmra.mrb[0].mxu0 %v486
        %v604 = vpop.f32.mrb[0].mxu0
        %v605 = vadd.f32 0.0, %v604
        %v606 = vpop.f32.mrb[0].mxu0
        %v607 = vpop.f32.mrb[0].mxu0
        %v608 = vadd.f32 0.0, %v607
        %v609 = vpop.f32.mrb[0].mxu0
        %610 = vmatprep.mubr.bf16.mxu0 0
        %611 = vmatmul.mubr.bf16.gmra.mrb[0].mxu0 %v489
        %v612 = vpop.f32.mrb[0].mxu0
        %v613 = vadd.f32 0.0, %v612
        %v614 = vpop.f32.mrb[0].mxu0
        %v615 = vpop.f32.mrb[0].mxu0
        %v616 = vadd.f32 0.0, %v615
        %v617 = vpop.f32.mrb[0].mxu0
        %618 = vmatprep.mubr.bf16.mxu0 0
        %619 = vmatmul.mubr.bf16.gmra.mrb[0].mxu0 %v492
        %v620 = vpop.f32.mrb[0].mxu0
        %v621 = vadd.f32 0.0, %v620
        %v622 = vpop.f32.mrb[0].mxu0
        %v623 = vpop.f32.mrb[0].mxu0
        %v624 = vadd.f32 0.0, %v623
        %v625 = vpop.f32.mrb[0].mxu0
        %626 = vmatprep.mubr.bf16.mxu0 0
        %627 = vmatmul.mubr.bf16.gmra.mrb[0].mxu0 %v495
        %v628 = vpop.f32.mrb[0].mxu0
        %v629 = vadd.f32 0.0, %v628
        %v630 = vpop.f32.mrb[0].mxu0
        %v631 = vpop.f32.mrb[0].mxu0
        %v632 = vadd.f32 0.0, %v631
        %v633 = vpop.f32.mrb[0].mxu0
        %634 = vmatprep.mubr.bf16.mxu0 0
        %635 = vmatmul.mubr.bf16.gmra.mrb[0].mxu0 %v498
        %v636 = vpop.f32.mrb[0].mxu0
        %v637 = vadd.f32 0.0, %v636
        %v638 = vpop.f32.mrb[0].mxu0
        %v639 = vpop.f32.mrb[0].mxu0
        %v640 = vadd.f32 0.0, %v639
        %v641 = vpop.f32.mrb[0].mxu0
        %642 = vmatprep.mubr.bf16.mxu0 0
        %643 = vmatmul.mubr.bf16.gmra.mrb[0].mxu0 %v501
        %v644 = vpop.f32.mrb[0].mxu0
        %v645 = vadd.f32 0.0, %v644
        %v646 = vpop.f32.mrb[0].mxu0
        %v647 = vpop.f32.mrb[0].mxu0
        %v648 = vadd.f32 0.0, %v647
        %v649 = vpop.f32.mrb[0].mxu0
        %650 = vmatprep.mubr.bf16.mxu0 0
        %651 = vmatmul.mubr.bf16.gmra.mrb[0].mxu0 %v504
        %v652 = vpop.f32.mrb[0].mxu0
        %v653 = vadd.f32 0.0, %v652
        %v654 = vpop.f32.mrb[0].mxu0
        %v655 = vpop.f32.mrb[0].mxu0
        %v656 = vadd.f32 0.0, %v655
        %v657 = vpop.f32.mrb[0].mxu0
        %658 = vmatprep.mubr.bf16.mxu0 0
        %659 = vmatmul.mubr.bf16.gmra.mrb[0].mxu0 %v507
        %v660 = vpop.f32.mrb[0].mxu0
        %v661 = vadd.f32 0.0, %v660
        %v662 = vpop.f32.mrb[0].mxu0
        %v663 = vpop.f32.mrb[0].mxu0
        %v664 = vadd.f32 0.0, %v663
        %v665 = vpop.f32.mrb[0].mxu0
        %666 = vmatprep.mubr.bf16.mxu0 0
        %667 = vmatmul.mubr.bf16.gmra.mrb[0].mxu0 %v510
        %v668 = vpop.f32.mrb[0].mxu0
        %v669 = vadd.f32 0.0, %v668
        %v670 = vpop.f32.mrb[0].mxu0
        %v671 = vpop.f32.mrb[0].mxu0
        %v672 = vadd.f32 0.0, %v671
        %v673 = vpop.f32.mrb[0].mxu0
        %674 = vmatprep.mubr.bf16.mxu0 0
        %675 = vmatmul.mubr.bf16.gmra.mrb[0].mxu0 %v513
        %v676 = vpop.f32.mrb[0].mxu0
        %v677 = vadd.f32 0.0, %v676
        %v678 = vpop.f32.mrb[0].mxu0
        %v679 = vpop.f32.mrb[0].mxu0
        %v680 = vadd.f32 0.0, %v679
        %v681 = vpop.f32.mrb[0].mxu0
        %682 = vmatprep.mubr.bf16.mxu0 0
        %683 = vmatmul.mubr.bf16.gmra.mrb[0].mxu0 %v516
        %v684 = vpop.f32.mrb[0].mxu0
        %v685 = vadd.f32 0.0, %v684
        %v686 = vpop.f32.mrb[0].mxu0
        %v687 = vpop.f32.mrb[0].mxu0
        %v688 = vadd.f32 0.0, %v687
        %v689 = vpop.f32.mrb[0].mxu0
        %690 = vmatprep.mubr.bf16.mxu0 0
        %691 = vmatmul.mubr.bf16.gmra.mrb[0].mxu0 %v519
        %v692 = vpop.f32.mrb[0].mxu0
        %v693 = vadd.f32 0.0, %v692
        %v694 = vpop.f32.mrb[0].mxu0
        %v695 = vpop.f32.mrb[0].mxu0
        %v696 = vadd.f32 0.0, %v695
        %v697 = vpop.f32.mrb[0].mxu0
        %698 = vmatprep.mubr.bf16.mxu0 0
        %699 = vmatmul.mubr.bf16.gmra.mrb[0].mxu0 %v522
        %v700 = vpop.f32.mrb[0].mxu0
        %v701 = vadd.f32 0.0, %v700
        %v702 = vpop.f32.mrb[0].mxu0
        %v703 = vpop.f32.mrb[0].mxu0
        %v704 = vadd.f32 0.0, %v703
        %v705 = vpop.f32.mrb[0].mxu0
        %706 = vmatprep.mubr.bf16.mxu0 0
        %707 = vmatmul.mubr.bf16.gmra.mrb[0].mxu0 %v525
        %v708 = vpop.f32.mrb[0].mxu0
        %v709 = vadd.f32 0.0, %v708
        %v710 = vpop.f32.mrb[0].mxu0
        %v711 = vpop.f32.mrb[0].mxu0
        %v712 = vadd.f32 0.0, %v711
        %v713 = vpop.f32.mrb[0].mxu0
        %714 = vmatprep.mubr.bf16.mxu0 0
        %715 = vmatmul.mubr.bf16.gmra.mrb[0].mxu0 %v528
        %v716 = vpop.f32.mrb[0].mxu0
        %v717 = vadd.f32 0.0, %v716
        %v718 = vpop.f32.mrb[0].mxu0
        %v719 = vpop.f32.mrb[0].mxu0
        %v720 = vadd.f32 0.0, %v719
        %v721 = vpop.f32.mrb[0].mxu0
        %722 = vdwg.mxu0
        %v723 = vld [vmem:[#allocation2] sm:$0xff]
        %v724 = vld [vmem:[#allocation2 + $0x8] sm:$0xff]
        %v725 = vld [vmem:[#allocation2 + $0x10] sm:$0xff]
        %v726 = vld [vmem:[#allocation2 + $0x18] sm:$0xff]
        %v727 = vld [vmem:[#allocation2 + $0x20] sm:$0xff]
        %v728 = vld [vmem:[#allocation2 + $0x28] sm:$0xff]
        %v729 = vld [vmem:[#allocation2 + $0x30] sm:$0xff]
        %v730 = vld [vmem:[#allocation2 + $0x38] sm:$0xff]
        %v731 = vld [vmem:[#allocation2 + $0x40] sm:$0xff]
        %v732 = vld [vmem:[#allocation2 + $0x48] sm:$0xff]
        %v733 = vld [vmem:[#allocation2 + $0x50] sm:$0xff]
        %v734 = vld [vmem:[#allocation2 + $0x58] sm:$0xff]
        %v735 = vld [vmem:[#allocation2 + $0x60] sm:$0xff]
        %v736 = vld [vmem:[#allocation2 + $0x68] sm:$0xff]
        %v737 = vld [vmem:[#allocation2 + $0x70] sm:$0xff]
        %v738 = vld [vmem:[#allocation2 + $0x78] sm:$0xff]
        %v739 = vld [vmem:[#allocation2 + $0x80] sm:$0xff]
        %v740 = vld [vmem:[#allocation2 + $0x88] sm:$0xff]
        %v741 = vld [vmem:[#allocation2 + $0x90] sm:$0xff]
        %v742 = vld [vmem:[#allocation2 + $0x98] sm:$0xff]
        %v743 = vld [vmem:[#allocation2 + $0xa0] sm:$0xff]
        %v744 = vld [vmem:[#allocation2 + $0xa8] sm:$0xff]
        %v745 = vld [vmem:[#allocation2 + $0xb0] sm:$0xff]
        %v746 = vld [vmem:[#allocation2 + $0xb8] sm:$0xff]
        %v747 = vld [vmem:[#allocation2 + $0xc0] sm:$0xff]
        %v748 = vld [vmem:[#allocation2 + $0xc8] sm:$0xff]
        %v749 = vld [vmem:[#allocation2 + $0xd0] sm:$0xff]
        %v750 = vld [vmem:[#allocation2 + $0xd8] sm:$0xff]
        %v751 = vld [vmem:[#allocation2 + $0xe0] sm:$0xff]
        %v752 = vld [vmem:[#allocation2 + $0xe8] sm:$0xff]
        %v753 = vld [vmem:[#allocation2 + $0xf0] sm:$0xff]
        %v754 = vld [vmem:[#allocation2 + $0xf8] sm:$0xff]
        %v755 = vld [vmem:[#allocation2 + $0x100] sm:$0xff]
        %v756 = vld [vmem:[#allocation2 + $0x108] sm:$0xff]
        %v757 = vld [vmem:[#allocation2 + $0x110] sm:$0xff]
        %v758 = vld [vmem:[#allocation2 + $0x118] sm:$0xff]
        %v759 = vld [vmem:[#allocation2 + $0x120] sm:$0xff]
        %v760 = vld [vmem:[#allocation2 + $0x128] sm:$0xff]
        %v761 = vld [vmem:[#allocation2 + $0x130] sm:$0xff]
        %v762 = vld [vmem:[#allocation2 + $0x138] sm:$0xff]
        %v763 = vld [vmem:[#allocation2 + $0x140] sm:$0xff]
        %v764 = vld [vmem:[#allocation2 + $0x148] sm:$0xff]
        %v765 = vld [vmem:[#allocation2 + $0x150] sm:$0xff]
        %v766 = vld [vmem:[#allocation2 + $0x158] sm:$0xff]
        %v767 = vld [vmem:[#allocation2 + $0x160] sm:$0xff]
        %v768 = vld [vmem:[#allocation2 + $0x168] sm:$0xff]
        %v769 = vld [vmem:[#allocation2 + $0x170] sm:$0xff]
        %v770 = vld [vmem:[#allocation2 + $0x178] sm:$0xff]
        %v771 = vld [vmem:[#allocation2 + $0x180] sm:$0xff]
        %v772 = vld [vmem:[#allocation2 + $0x188] sm:$0xff]
        %v773 = vld [vmem:[#allocation2 + $0x190] sm:$0xff]
        %v774 = vld [vmem:[#allocation2 + $0x198] sm:$0xff]
        %v775 = vld [vmem:[#allocation2 + $0x1a0] sm:$0xff]
        %v776 = vld [vmem:[#allocation2 + $0x1a8] sm:$0xff]
        %v777 = vld [vmem:[#allocation2 + $0x1b0] sm:$0xff]
        %v778 = vld [vmem:[#allocation2 + $0x1b8] sm:$0xff]
        %v779 = vld [vmem:[#allocation2 + $0x1c0] sm:$0xff]
        %v780 = vld [vmem:[#allocation2 + $0x1c8] sm:$0xff]
        %v781 = vld [vmem:[#allocation2 + $0x1d0] sm:$0xff]
        %v782 = vld [vmem:[#allocation2 + $0x1d8] sm:$0xff]
        %v783 = vld [vmem:[#allocation2 + $0x1e0] sm:$0xff]
        %v784 = vld [vmem:[#allocation2 + $0x1e8] sm:$0xff]
        %v785 = vld [vmem:[#allocation2 + $0x1f0] sm:$0xff]
        %v786 = vld [vmem:[#allocation2 + $0x1f8] sm:$0xff]
        %v787 = vld [vmem:[#allocation2 + $0x200] sm:$0xff]
        %v788 = vld [vmem:[#allocation2 + $0x208] sm:$0xff]
        %v789 = vld [vmem:[#allocation2 + $0x210] sm:$0xff]
        %v790 = vld [vmem:[#allocation2 + $0x218] sm:$0xff]
        %v791 = vld [vmem:[#allocation2 + $0x220] sm:$0xff]
        %v792 = vld [vmem:[#allocation2 + $0x228] sm:$0xff]
        %v793 = vld [vmem:[#allocation2 + $0x230] sm:$0xff]
        %v794 = vld [vmem:[#allocation2 + $0x238] sm:$0xff]
        %v795 = vld [vmem:[#allocation2 + $0x240] sm:$0xff]
        %v796 = vld [vmem:[#allocation2 + $0x248] sm:$0xff]
        %v797 = vld [vmem:[#allocation2 + $0x250] sm:$0xff]
        %v798 = vld [vmem:[#allocation2 + $0x258] sm:$0xff]
        %v799 = vld [vmem:[#allocation2 + $0x260] sm:$0xff]
        %v800 = vld [vmem:[#allocation2 + $0x268] sm:$0xff]
        %v801 = vld [vmem:[#allocation2 + $0x270] sm:$0xff]
        %v802 = vld [vmem:[#allocation2 + $0x278] sm:$0xff]
        %v803 = vld [vmem:[#allocation2 + $0x280] sm:$0xff]
        %v804 = vld [vmem:[#allocation2 + $0x288] sm:$0xff]
        %v805 = vld [vmem:[#allocation2 + $0x290] sm:$0xff]
        %v806 = vld [vmem:[#allocation2 + $0x298] sm:$0xff]
        %v807 = vld [vmem:[#allocation2 + $0x2a0] sm:$0xff]
        %v808 = vld [vmem:[#allocation2 + $0x2a8] sm:$0xff]
        %v809 = vld [vmem:[#allocation2 + $0x2b0] sm:$0xff]
        %v810 = vld [vmem:[#allocation2 + $0x2b8] sm:$0xff]
        %v811 = vld [vmem:[#allocation2 + $0x2c0] sm:$0xff]
        %v812 = vld [vmem:[#allocation2 + $0x2c8] sm:$0xff]
        %v813 = vld [vmem:[#allocation2 + $0x2d0] sm:$0xff]
        %v814 = vld [vmem:[#allocation2 + $0x2d8] sm:$0xff]
        %v815 = vld [vmem:[#allocation2 + $0x2e0] sm:$0xff]
        %v816 = vld [vmem:[#allocation2 + $0x2e8] sm:$0xff]
        %v817 = vld [vmem:[#allocation2 + $0x2f0] sm:$0xff]
        %v818 = vld [vmem:[#allocation2 + $0x2f8] sm:$0xff]
        %v819 = vld [vmem:[#allocation2 + $0x300] sm:$0xff]
        %v820 = vld [vmem:[#allocation2 + $0x308] sm:$0xff]
        %v821 = vld [vmem:[#allocation2 + $0x310] sm:$0xff]
        %v822 = vld [vmem:[#allocation2 + $0x318] sm:$0xff]
        %v823 = vld [vmem:[#allocation2 + $0x320] sm:$0xff]
        %v824 = vld [vmem:[#allocation2 + $0x328] sm:$0xff]
        %v825 = vld [vmem:[#allocation2 + $0x330] sm:$0xff]
        %v826 = vld [vmem:[#allocation2 + $0x338] sm:$0xff]
        %v827 = vld [vmem:[#allocation2 + $0x340] sm:$0xff]
        %v828 = vld [vmem:[#allocation2 + $0x348] sm:$0xff]
        %v829 = vld [vmem:[#allocation2 + $0x350] sm:$0xff]
        %v830 = vld [vmem:[#allocation2 + $0x358] sm:$0xff]
        %v831 = vld [vmem:[#allocation2 + $0x360] sm:$0xff]
        %v832 = vld [vmem:[#allocation2 + $0x368] sm:$0xff]
        %v833 = vld [vmem:[#allocation2 + $0x370] sm:$0xff]
        %v834 = vld [vmem:[#allocation2 + $0x378] sm:$0xff]
        %v835 = vld [vmem:[#allocation2 + $0x380] sm:$0xff]
        %v836 = vld [vmem:[#allocation2 + $0x388] sm:$0xff]
        %v837 = vld [vmem:[#allocation2 + $0x390] sm:$0xff]
        %v838 = vld [vmem:[#allocation2 + $0x398] sm:$0xff]
        %v839 = vld [vmem:[#allocation2 + $0x3a0] sm:$0xff]
        %v840 = vld [vmem:[#allocation2 + $0x3a8] sm:$0xff]
        %v841 = vld [vmem:[#allocation2 + $0x3b0] sm:$0xff]
        %v842 = vld [vmem:[#allocation2 + $0x3b8] sm:$0xff]
        %v843 = vpack.c.bf16 %v568, %v565
        %v844 = vpack.c.bf16 %v576, %v573
        %v845 = vpack.c.bf16 %v584, %v581
        %v846 = vpack.c.bf16 %v592, %v589
        %v847 = vpack.c.bf16 %v600, %v597
        %v848 = vpack.c.bf16 %v608, %v605
        %v849 = vpack.c.bf16 %v616, %v613
        %v850 = vpack.c.bf16 %v624, %v621
        %v851 = vpack.c.bf16 %v632, %v629
        %v852 = vpack.c.bf16 %v640, %v637
        %v853 = vpack.c.bf16 %v648, %v645
        %v854 = vpack.c.bf16 %v656, %v653
        %v855 = vpack.c.bf16 %v664, %v661
        %v856 = vpack.c.bf16 %v672, %v669
        %v857 = vpack.c.bf16 %v680, %v677
        %v858 = vpack.c.bf16 %v688, %v685
        %v859 = vpack.c.bf16 %v696, %v693
        %v860 = vpack.c.bf16 %v704, %v701
        %v861 = vpack.c.bf16 %v712, %v709
        %v862 = vpack.c.bf16 %v720, %v717
        %v867 = vunpack.c.l.b16 %v319
        %v868 = vunpack.c.h.b16 %v319
        %v869 = vunpack.c.l.b16 %v320
        %v870 = vunpack.c.l.b16 %v321
        %v871 = vunpack.c.h.b16 %v321
        %v872 = vunpack.c.l.b16 %v322
        %v873 = vpack.c.b16 %v870, %v867
        %v874 = vpack.c.b16 %v871, %v868
        %v875 = vpack.c.b16 %v872, %v869
        %v880 = vsel %vm469, %v843, 0
        %v883 = vsel %vm469, %v844, 0
        %v886 = vsel %vm469, %v845, 0
        %v889 = vsel %vm469, %v846, 0
        %v892 = vsel %vm469, %v847, 0
        %v895 = vsel %vm469, %v848, 0
        %v898 = vsel %vm469, %v849, 0
        %v901 = vsel %vm469, %v850, 0
        %v904 = vsel %vm469, %v851, 0
        %v907 = vsel %vm469, %v852, 0
        %v910 = vsel %vm469, %v853, 0
        %v913 = vsel %vm469, %v854, 0
        %v916 = vsel %vm469, %v855, 0
        %v919 = vsel %vm469, %v856, 0
        %v922 = vsel %vm469, %v857, 0
        %v925 = vsel %vm469, %v858, 0
        %v928 = vsel %vm469, %v859, 0
        %v931 = vsel %vm469, %v860, 0
        %v934 = vsel %vm469, %v861, 0
        %v937 = vsel %vm469, %v862, 0
        %939 = vmatprep.subr.bf16.mxu0 %v874
        %940 = vmatpush1.bf16.msra.mxu0 %v873
        %941 = vmatprep.subr.bf16.mxu0 0
        %942 = vmatpush1.bf16.msra.mxu0 0
        %943 = vmatprep.subr.bf16.mxu0 0
        %944 = vmatpush1.bf16.msra.mxu0 0
        %945 = vmatprep.subr.bf16.mxu0 0
        %946 = vmatpush1.bf16.msra.mxu0 0
        %947 = vmatprep.subr.bf16.mxu0 0
        %948 = vmatpush1.bf16.msra.mxu0 0
        %949 = vmatprep.subr.bf16.mxu0 0
        %950 = vmatpush1.bf16.msra.mxu0 0
        %951 = vmatprep.subr.bf16.mxu0 0
        %952 = vmatpush1.bf16.msra.mxu0 0
        %953 = vmatprep.subr.bf16.mxu0 0
        %954 = vmatpush1.bf16.msra.mxu0 0
        %955 = vmatprep.subr.bf16.mxu0 0
        %956 = vmatpush1.bf16.msra.mxu0 0
        %957 = vmatprep.subr.bf16.mxu0 0
        %958 = vmatpush1.bf16.msra.mxu0 0
        %959 = vmatprep.subr.bf16.mxu0 0
        %960 = vmatpush1.bf16.msra.mxu0 0
        %961 = vmatprep.subr.bf16.mxu0 0
        %962 = vmatpush1.bf16.msra.mxu0 0
        %963 = vmatprep.subr.bf16.mxu0 0
        %964 = vmatpush1.bf16.msra.mxu0 0
        %965 = vmatprep.subr.bf16.mxu0 0
        %966 = vmatpush1.bf16.msra.mxu0 0
        %967 = vmatprep.subr.bf16.mxu0 0
        %968 = vmatpush1.bf16.msra.mxu0 0
        %969 = vmatprep.subr.bf16.mxu0 0
        %970 = vmatpush1.bf16.msra.mxu0 0
        %971 = vmatprep.mubr.bf16.mxu0 0
        %972 = vmatmul.mubr.bf16.gmra.mrb[0].mxu0 %v880
        %v973 = vpop.f32.mrb[0].mxu0
        %v974 = vadd.f32 0.0, %v973
        %v975 = vpop.f32.mrb[0].mxu0
        %v976 = vadd.f32 0.0, %v975
        %v977 = vpop.f32.mrb[0].mxu0
        %v978 = vadd.f32 0.0, %v977
        %v979 = vpop.f32.mrb[0].mxu0
        %v980 = vadd.f32 0.0, %v979
        %981 = vmatprep.mubr.bf16.mxu0 0
        %982 = vmatmul.mubr.bf16.gmra.mrb[0].mxu0 %v883
        %v983 = vpop.f32.mrb[0].mxu0
        %v984 = vadd.f32 0.0, %v983
        %v985 = vpop.f32.mrb[0].mxu0
        %v986 = vadd.f32 0.0, %v985
        %v987 = vpop.f32.mrb[0].mxu0
        %v988 = vadd.f32 0.0, %v987
        %v989 = vpop.f32.mrb[0].mxu0
        %v990 = vadd.f32 0.0, %v989
        %991 = vmatprep.mubr.bf16.mxu0 0
        %992 = vmatmul.mubr.bf16.gmra.mrb[0].mxu0 %v886
        %v993 = vpop.f32.mrb[0].mxu0
        %v994 = vadd.f32 0.0, %v993
        %v995 = vpop.f32.mrb[0].mxu0
        %v996 = vadd.f32 0.0, %v995
        %v997 = vpop.f32.mrb[0].mxu0
        %v998 = vadd.f32 0.0, %v997
        %v999 = vpop.f32.mrb[0].mxu0
        %v1000 = vadd.f32 0.0, %v999
        %1001 = vmatprep.mubr.bf16.mxu0 0
        %1002 = vmatmul.mubr.bf16.gmra.mrb[0].mxu0 %v889
        %v1003 = vpop.f32.mrb[0].mxu0
        %v1004 = vadd.f32 0.0, %v1003
        %v1005 = vpop.f32.mrb[0].mxu0
        %v1006 = vadd.f32 0.0, %v1005
        %v1007 = vpop.f32.mrb[0].mxu0
        %v1008 = vadd.f32 0.0, %v1007
        %v1009 = vpop.f32.mrb[0].mxu0
        %v1010 = vadd.f32 0.0, %v1009
        %1011 = vmatprep.mubr.bf16.mxu0 0
        %1012 = vmatmul.mubr.bf16.gmra.mrb[0].mxu0 %v892
        %v1013 = vpop.f32.mrb[0].mxu0
        %v1014 = vadd.f32 0.0, %v1013
        %v1015 = vpop.f32.mrb[0].mxu0
        %v1016 = vadd.f32 0.0, %v1015
        %v1017 = vpop.f32.mrb[0].mxu0
        %v1018 = vadd.f32 0.0, %v1017
        %v1019 = vpop.f32.mrb[0].mxu0
        %v1020 = vadd.f32 0.0, %v1019
        %1021 = vmatprep.mubr.bf16.mxu0 0
        %1022 = vmatmul.mubr.bf16.gmra.mrb[0].mxu0 %v895
        %v1023 = vpop.f32.mrb[0].mxu0
        %v1024 = vadd.f32 0.0, %v1023
        %v1025 = vpop.f32.mrb[0].mxu0
        %v1026 = vadd.f32 0.0, %v1025
        %v1027 = vpop.f32.mrb[0].mxu0
        %v1028 = vadd.f32 0.0, %v1027
        %v1029 = vpop.f32.mrb[0].mxu0
        %v1030 = vadd.f32 0.0, %v1029
        %1031 = vmatprep.mubr.bf16.mxu0 0
        %1032 = vmatmul.mubr.bf16.gmra.mrb[0].mxu0 %v898
        %v1033 = vpop.f32.mrb[0].mxu0
        %v1034 = vadd.f32 0.0, %v1033
        %v1035 = vpop.f32.mrb[0].mxu0
        %v1036 = vadd.f32 0.0, %v1035
        %v1037 = vpop.f32.mrb[0].mxu0
        %v1038 = vadd.f32 0.0, %v1037
        %v1039 = vpop.f32.mrb[0].mxu0
        %v1040 = vadd.f32 0.0, %v1039
        %1041 = vmatprep.mubr.bf16.mxu0 0
        %1042 = vmatmul.mubr.bf16.gmra.mrb[0].mxu0 %v901
        %v1043 = vpop.f32.mrb[0].mxu0
        %v1044 = vadd.f32 0.0, %v1043
        %v1045 = vpop.f32.mrb[0].mxu0
        %v1046 = vadd.f32 0.0, %v1045
        %v1047 = vpop.f32.mrb[0].mxu0
        %v1048 = vadd.f32 0.0, %v1047
        %v1049 = vpop.f32.mrb[0].mxu0
        %v1050 = vadd.f32 0.0, %v1049
        %1051 = vmatprep.mubr.bf16.mxu0 0
        %1052 = vmatmul.mubr.bf16.gmra.mrb[0].mxu0 %v904
        %v1053 = vpop.f32.mrb[0].mxu0
        %v1054 = vadd.f32 0.0, %v1053
        %v1055 = vpop.f32.mrb[0].mxu0
        %v1056 = vadd.f32 0.0, %v1055
        %v1057 = vpop.f32.mrb[0].mxu0
        %v1058 = vadd.f32 0.0, %v1057
        %v1059 = vpop.f32.mrb[0].mxu0
        %v1060 = vadd.f32 0.0, %v1059
        %1061 = vmatprep.mubr.bf16.mxu0 0
        %1062 = vmatmul.mubr.bf16.gmra.mrb[0].mxu0 %v907
        %v1063 = vpop.f32.mrb[0].mxu0
        %v1064 = vadd.f32 0.0, %v1063
        %v1065 = vpop.f32.mrb[0].mxu0
        %v1066 = vadd.f32 0.0, %v1065
        %v1067 = vpop.f32.mrb[0].mxu0
        %v1068 = vadd.f32 0.0, %v1067
        %v1069 = vpop.f32.mrb[0].mxu0
        %v1070 = vadd.f32 0.0, %v1069
        %1071 = vmatprep.mubr.bf16.mxu0 0
        %1072 = vmatmul.mubr.bf16.gmra.mrb[0].mxu0 %v910
        %v1073 = vpop.f32.mrb[0].mxu0
        %v1074 = vadd.f32 0.0, %v1073
        %v1075 = vpop.f32.mrb[0].mxu0
        %v1076 = vadd.f32 0.0, %v1075
        %v1077 = vpop.f32.mrb[0].mxu0
        %v1078 = vadd.f32 0.0, %v1077
        %v1079 = vpop.f32.mrb[0].mxu0
        %v1080 = vadd.f32 0.0, %v1079
        %1081 = vmatprep.mubr.bf16.mxu0 0
        %1082 = vmatmul.mubr.bf16.gmra.mrb[0].mxu0 %v913
        %v1083 = vpop.f32.mrb[0].mxu0
        %v1084 = vadd.f32 0.0, %v1083
        %v1085 = vpop.f32.mrb[0].mxu0
        %v1086 = vadd.f32 0.0, %v1085
        %v1087 = vpop.f32.mrb[0].mxu0
        %v1088 = vadd.f32 0.0, %v1087
        %v1089 = vpop.f32.mrb[0].mxu0
        %v1090 = vadd.f32 0.0, %v1089
        %1091 = vmatprep.mubr.bf16.mxu0 0
        %1092 = vmatmul.mubr.bf16.gmra.mrb[0].mxu0 %v916
        %v1093 = vpop.f32.mrb[0].mxu0
        %v1094 = vadd.f32 0.0, %v1093
        %v1095 = vpop.f32.mrb[0].mxu0
        %v1096 = vadd.f32 0.0, %v1095
        %v1097 = vpop.f32.mrb[0].mxu0
        %v1098 = vadd.f32 0.0, %v1097
        %v1099 = vpop.f32.mrb[0].mxu0
        %v1100 = vadd.f32 0.0, %v1099
        %1101 = vmatprep.mubr.bf16.mxu0 0
        %1102 = vmatmul.mubr.bf16.gmra.mrb[0].mxu0 %v919
        %v1103 = vpop.f32.mrb[0].mxu0
        %v1104 = vadd.f32 0.0, %v1103
        %v1105 = vpop.f32.mrb[0].mxu0
        %v1106 = vadd.f32 0.0, %v1105
        %v1107 = vpop.f32.mrb[0].mxu0
        %v1108 = vadd.f32 0.0, %v1107
        %v1109 = vpop.f32.mrb[0].mxu0
        %v1110 = vadd.f32 0.0, %v1109
        %1111 = vmatprep.mubr.bf16.mxu0 0
        %1112 = vmatmul.mubr.bf16.gmra.mrb[0].mxu0 %v922
        %v1113 = vpop.f32.mrb[0].mxu0
        %v1114 = vadd.f32 0.0, %v1113
        %v1115 = vpop.f32.mrb[0].mxu0
        %v1116 = vadd.f32 0.0, %v1115
        %v1117 = vpop.f32.mrb[0].mxu0
        %v1118 = vadd.f32 0.0, %v1117
        %v1119 = vpop.f32.mrb[0].mxu0
        %v1120 = vadd.f32 0.0, %v1119
        %1121 = vmatprep.mubr.bf16.mxu0 0
        %1122 = vmatmul.mubr.bf16.gmra.mrb[0].mxu0 %v925
        %v1123 = vpop.f32.mrb[0].mxu0
        %v1124 = vadd.f32 0.0, %v1123
        %v1125 = vpop.f32.mrb[0].mxu0
        %v1126 = vadd.f32 0.0, %v1125
        %v1127 = vpop.f32.mrb[0].mxu0
        %v1128 = vadd.f32 0.0, %v1127
        %v1129 = vpop.f32.mrb[0].mxu0
        %v1130 = vadd.f32 0.0, %v1129
        %1131 = vmatprep.mubr.bf16.mxu0 0
        %1132 = vmatmul.mubr.bf16.gmra.mrb[0].mxu0 %v928
        %v1133 = vpop.f32.mrb[0].mxu0
        %v1134 = vadd.f32 0.0, %v1133
        %v1135 = vpop.f32.mrb[0].mxu0
        %v1136 = vadd.f32 0.0, %v1135
        %v1137 = vpop.f32.mrb[0].mxu0
        %v1138 = vadd.f32 0.0, %v1137
        %v1139 = vpop.f32.mrb[0].mxu0
        %v1140 = vadd.f32 0.0, %v1139
        %1141 = vmatprep.mubr.bf16.mxu0 0
        %1142 = vmatmul.mubr.bf16.gmra.mrb[0].mxu0 %v931
        %v1143 = vpop.f32.mrb[0].mxu0
        %v1144 = vadd.f32 0.0, %v1143
        %v1145 = vpop.f32.mrb[0].mxu0
        %v1146 = vadd.f32 0.0, %v1145
        %v1147 = vpop.f32.mrb[0].mxu0
        %v1148 = vadd.f32 0.0, %v1147
        %v1149 = vpop.f32.mrb[0].mxu0
        %v1150 = vadd.f32 0.0, %v1149
        %1151 = vmatprep.mubr.bf16.mxu0 0
        %1152 = vmatmul.mubr.bf16.gmra.mrb[0].mxu0 %v934
        %v1153 = vpop.f32.mrb[0].mxu0
        %v1154 = vadd.f32 0.0, %v1153
        %v1155 = vpop.f32.mrb[0].mxu0
        %v1156 = vadd.f32 0.0, %v1155
        %v1157 = vpop.f32.mrb[0].mxu0
        %v1158 = vadd.f32 0.0, %v1157
        %v1159 = vpop.f32.mrb[0].mxu0
        %v1160 = vadd.f32 0.0, %v1159
        %1161 = vmatprep.mubr.bf16.mxu0 0
        %1162 = vmatmul.mubr.bf16.gmra.mrb[0].mxu0 %v937
        %v1163 = vpop.f32.mrb[0].mxu0
        %v1164 = vadd.f32 0.0, %v1163
        %v1165 = vpop.f32.mrb[0].mxu0
        %v1166 = vadd.f32 0.0, %v1165
        %v1167 = vpop.f32.mrb[0].mxu0
        %v1168 = vadd.f32 0.0, %v1167
        %v1169 = vpop.f32.mrb[0].mxu0
        %v1170 = vadd.f32 0.0, %v1169
        %1171 = vdwg.mxu0
        %1172 = vmatprep.subr.bf16.mxu0 0
        %1173 = vmatpush1.bf16.msra.mxu0 %v875
        %1174 = vmatprep.subr.bf16.mxu0 0
        %1175 = vmatpush1.bf16.msra.mxu0 0
        %1176 = vmatprep.subr.bf16.mxu0 0
        %1177 = vmatpush1.bf16.msra.mxu0 0
        %1178 = vmatprep.subr.bf16.mxu0 0
        %1179 = vmatpush1.bf16.msra.mxu0 0
        %1180 = vmatprep.subr.bf16.mxu0 0
        %1181 = vmatpush1.bf16.msra.mxu0 0
        %1182 = vmatprep.subr.bf16.mxu0 0
        %1183 = vmatpush1.bf16.msra.mxu0 0
        %1184 = vmatprep.subr.bf16.mxu0 0
        %1185 = vmatpush1.bf16.msra.mxu0 0
        %1186 = vmatprep.subr.bf16.mxu0 0
        %1187 = vmatpush1.bf16.msra.mxu0 0
        %1188 = vmatprep.subr.bf16.mxu0 0
        %1189 = vmatpush1.bf16.msra.mxu0 0
        %1190 = vmatprep.subr.bf16.mxu0 0
        %1191 = vmatpush1.bf16.msra.mxu0 0
        %1192 = vmatprep.subr.bf16.mxu0 0
        %1193 = vmatpush1.bf16.msra.mxu0 0
        %1194 = vmatprep.subr.bf16.mxu0 0
        %1195 = vmatpush1.bf16.msra.mxu0 0
        %1196 = vmatprep.subr.bf16.mxu0 0
        %1197 = vmatpush1.bf16.msra.mxu0 0
        %1198 = vmatprep.subr.bf16.mxu0 0
        %1199 = vmatpush1.bf16.msra.mxu0 0
        %1200 = vmatprep.subr.bf16.mxu0 0
        %1201 = vmatpush1.bf16.msra.mxu0 0
        %1202 = vmatprep.subr.bf16.mxu0 0
        %1203 = vmatpush1.bf16.msra.mxu0 0
        %1204 = vmatprep.mubr.bf16.mxu0 0
        %1205 = vmatmul.mubr.bf16.gmra.mrb[0].mxu0 %v880
        %v1206 = vpop.f32.mrb[0].mxu0
        %v1207 = vadd.f32 0.0, %v1206
        %v1208 = vpop.f32.mrb[0].mxu0
        %v1209 = vpop.f32.mrb[0].mxu0
        %v1210 = vadd.f32 0.0, %v1209
        %v1211 = vpop.f32.mrb[0].mxu0
        %1212 = vmatprep.mubr.bf16.mxu0 0
        %1213 = vmatmul.mubr.bf16.gmra.mrb[0].mxu0 %v883
        %v1214 = vpop.f32.mrb[0].mxu0
        %v1215 = vadd.f32 0.0, %v1214
        %v1216 = vpop.f32.mrb[0].mxu0
        %v1217 = vpop.f32.mrb[0].mxu0
        %v1218 = vadd.f32 0.0, %v1217
        %v1219 = vpop.f32.mrb[0].mxu0
        %1220 = vmatprep.mubr.bf16.mxu0 0
        %1221 = vmatmul.mubr.bf16.gmra.mrb[0].mxu0 %v886
        %v1222 = vpop.f32.mrb[0].mxu0
        %v1223 = vadd.f32 0.0, %v1222
        %v1224 = vpop.f32.mrb[0].mxu0
        %v1225 = vpop.f32.mrb[0].mxu0
        %v1226 = vadd.f32 0.0, %v1225
        %v1227 = vpop.f32.mrb[0].mxu0
        %1228 = vmatprep.mubr.bf16.mxu0 0
        %1229 = vmatmul.mubr.bf16.gmra.mrb[0].mxu0 %v889
        %v1230 = vpop.f32.mrb[0].mxu0
        %v1231 = vadd.f32 0.0, %v1230
        %v1232 = vpop.f32.mrb[0].mxu0
        %v1233 = vpop.f32.mrb[0].mxu0
        %v1234 = vadd.f32 0.0, %v1233
        %v1235 = vpop.f32.mrb[0].mxu0
        %1236 = vmatprep.mubr.bf16.mxu0 0
        %1237 = vmatmul.mubr.bf16.gmra.mrb[0].mxu0 %v892
        %v1238 = vpop.f32.mrb[0].mxu0
        %v1239 = vadd.f32 0.0, %v1238
        %v1240 = vpop.f32.mrb[0].mxu0
        %v1241 = vpop.f32.mrb[0].mxu0
        %v1242 = vadd.f32 0.0, %v1241
        %v1243 = vpop.f32.mrb[0].mxu0
        %1244 = vmatprep.mubr.bf16.mxu0 0
        %1245 = vmatmul.mubr.bf16.gmra.mrb[0].mxu0 %v895
        %v1246 = vpop.f32.mrb[0].mxu0
        %v1247 = vadd.f32 0.0, %v1246
        %v1248 = vpop.f32.mrb[0].mxu0
        %v1249 = vpop.f32.mrb[0].mxu0
        %v1250 = vadd.f32 0.0, %v1249
        %v1251 = vpop.f32.mrb[0].mxu0
        %1252 = vmatprep.mubr.bf16.mxu0 0
        %1253 = vmatmul.mubr.bf16.gmra.mrb[0].mxu0 %v898
        %v1254 = vpop.f32.mrb[0].mxu0
        %v1255 = vadd.f32 0.0, %v1254
        %v1256 = vpop.f32.mrb[0].mxu0
        %v1257 = vpop.f32.mrb[0].mxu0
        %v1258 = vadd.f32 0.0, %v1257
        %v1259 = vpop.f32.mrb[0].mxu0
        %1260 = vmatprep.mubr.bf16.mxu0 0
        %1261 = vmatmul.mubr.bf16.gmra.mrb[0].mxu0 %v901
        %v1262 = vpop.f32.mrb[0].mxu0
        %v1263 = vadd.f32 0.0, %v1262
        %v1264 = vpop.f32.mrb[0].mxu0
        %v1265 = vpop.f32.mrb[0].mxu0
        %v1266 = vadd.f32 0.0, %v1265
        %v1267 = vpop.f32.mrb[0].mxu0
        %1268 = vmatprep.mubr.bf16.mxu0 0
        %1269 = vmatmul.mubr.bf16.gmra.mrb[0].mxu0 %v904
        %v1270 = vpop.f32.mrb[0].mxu0
        %v1271 = vadd.f32 0.0, %v1270
        %v1272 = vpop.f32.mrb[0].mxu0
        %v1273 = vpop.f32.mrb[0].mxu0
        %v1274 = vadd.f32 0.0, %v1273
        %v1275 = vpop.f32.mrb[0].mxu0
        %1276 = vmatprep.mubr.bf16.mxu0 0
        %1277 = vmatmul.mubr.bf16.gmra.mrb[0].mxu0 %v907
        %v1278 = vpop.f32.mrb[0].mxu0
        %v1279 = vadd.f32 0.0, %v1278
        %v1280 = vpop.f32.mrb[0].mxu0
        %v1281 = vpop.f32.mrb[0].mxu0
        %v1282 = vadd.f32 0.0, %v1281
        %v1283 = vpop.f32.mrb[0].mxu0
        %1284 = vmatprep.mubr.bf16.mxu0 0
        %1285 = vmatmul.mubr.bf16.gmra.mrb[0].mxu0 %v910
        %v1286 = vpop.f32.mrb[0].mxu0
        %v1287 = vadd.f32 0.0, %v1286
        %v1288 = vpop.f32.mrb[0].mxu0
        %v1289 = vpop.f32.mrb[0].mxu0
        %v1290 = vadd.f32 0.0, %v1289
        %v1291 = vpop.f32.mrb[0].mxu0
        %1292 = vmatprep.mubr.bf16.mxu0 0
        %1293 = vmatmul.mubr.bf16.gmra.mrb[0].mxu0 %v913
        %v1294 = vpop.f32.mrb[0].mxu0
        %v1295 = vadd.f32 0.0, %v1294
        %v1296 = vpop.f32.mrb[0].mxu0
        %v1297 = vpop.f32.mrb[0].mxu0
        %v1298 = vadd.f32 0.0, %v1297
        %v1299 = vpop.f32.mrb[0].mxu0
        %1300 = vmatprep.mubr.bf16.mxu0 0
        %1301 = vmatmul.mubr.bf16.gmra.mrb[0].mxu0 %v916
        %v1302 = vpop.f32.mrb[0].mxu0
        %v1303 = vadd.f32 0.0, %v1302
        %v1304 = vpop.f32.mrb[0].mxu0
        %v1305 = vpop.f32.mrb[0].mxu0
        %v1306 = vadd.f32 0.0, %v1305
        %v1307 = vpop.f32.mrb[0].mxu0
        %1308 = vmatprep.mubr.bf16.mxu0 0
        %1309 = vmatmul.mubr.bf16.gmra.mrb[0].mxu0 %v919
        %v1310 = vpop.f32.mrb[0].mxu0
        %v1311 = vadd.f32 0.0, %v1310
        %v1312 = vpop.f32.mrb[0].mxu0
        %v1313 = vpop.f32.mrb[0].mxu0
        %v1314 = vadd.f32 0.0, %v1313
        %v1315 = vpop.f32.mrb[0].mxu0
        %1316 = vmatprep.mubr.bf16.mxu0 0
        %1317 = vmatmul.mubr.bf16.gmra.mrb[0].mxu0 %v922
        %v1318 = vpop.f32.mrb[0].mxu0
        %v1319 = vadd.f32 0.0, %v1318
        %v1320 = vpop.f32.mrb[0].mxu0
        %v1321 = vpop.f32.mrb[0].mxu0
        %v1322 = vadd.f32 0.0, %v1321
        %v1323 = vpop.f32.mrb[0].mxu0
        %1324 = vmatprep.mubr.bf16.mxu0 0
        %1325 = vmatmul.mubr.bf16.gmra.mrb[0].mxu0 %v925
        %v1326 = vpop.f32.mrb[0].mxu0
        %v1327 = vadd.f32 0.0, %v1326
        %v1328 = vpop.f32.mrb[0].mxu0
        %v1329 = vpop.f32.mrb[0].mxu0
        %v1330 = vadd.f32 0.0, %v1329
        %v1331 = vpop.f32.mrb[0].mxu0
        %1332 = vmatprep.mubr.bf16.mxu0 0
        %1333 = vmatmul.mubr.bf16.gmra.mrb[0].mxu0 %v928
        %v1334 = vpop.f32.mrb[0].mxu0
        %v1335 = vadd.f32 0.0, %v1334
        %v1336 = vpop.f32.mrb[0].mxu0
        %v1337 = vpop.f32.mrb[0].mxu0
        %v1338 = vadd.f32 0.0, %v1337
        %v1339 = vpop.f32.mrb[0].mxu0
        %1340 = vmatprep.mubr.bf16.mxu0 0
        %1341 = vmatmul.mubr.bf16.gmra.mrb[0].mxu0 %v931
        %v1342 = vpop.f32.mrb[0].mxu0
        %v1343 = vadd.f32 0.0, %v1342
        %v1344 = vpop.f32.mrb[0].mxu0
        %v1345 = vpop.f32.mrb[0].mxu0
        %v1346 = vadd.f32 0.0, %v1345
        %v1347 = vpop.f32.mrb[0].mxu0
        %1348 = vmatprep.mubr.bf16.mxu0 0
        %1349 = vmatmul.mubr.bf16.gmra.mrb[0].mxu0 %v934
        %v1350 = vpop.f32.mrb[0].mxu0
        %v1351 = vadd.f32 0.0, %v1350
        %v1352 = vpop.f32.mrb[0].mxu0
        %v1353 = vpop.f32.mrb[0].mxu0
        %v1354 = vadd.f32 0.0, %v1353
        %v1355 = vpop.f32.mrb[0].mxu0
        %1356 = vmatprep.mubr.bf16.mxu0 0
        %1357 = vmatmul.mubr.bf16.gmra.mrb[0].mxu0 %v937
        %v1358 = vpop.f32.mrb[0].mxu0
        %v1359 = vadd.f32 0.0, %v1358
        %v1360 = vpop.f32.mrb[0].mxu0
        %v1361 = vpop.f32.mrb[0].mxu0
        %v1362 = vadd.f32 0.0, %v1361
        %v1363 = vpop.f32.mrb[0].mxu0
        %1364 = vdwg.mxu0
        %v1365 = vadd.f32 %v723, %v974
        %v1366 = vadd.f32 %v724, %v976
        %v1367 = vadd.f32 %v725, %v1207
        %v1368 = vadd.f32 %v726, %v978
        %v1369 = vadd.f32 %v727, %v980
        %v1370 = vadd.f32 %v728, %v1210
        %v1371 = vadd.f32 %v729, %v984
        %v1372 = vadd.f32 %v730, %v986
        %v1373 = vadd.f32 %v731, %v1215
        %v1374 = vadd.f32 %v732, %v988
        %v1375 = vadd.f32 %v733, %v990
        %v1376 = vadd.f32 %v734, %v1218
        %v1377 = vadd.f32 %v735, %v994
        %v1378 = vadd.f32 %v736, %v996
        %v1379 = vadd.f32 %v737, %v1223
        %v1380 = vadd.f32 %v738, %v998
        %v1381 = vadd.f32 %v739, %v1000
        %v1382 = vadd.f32 %v740, %v1226
        %v1383 = vadd.f32 %v741, %v1004
        %v1384 = vadd.f32 %v742, %v1006
        %v1385 = vadd.f32 %v743, %v1231
        %v1386 = vadd.f32 %v744, %v1008
        %v1387 = vadd.f32 %v745, %v1010
        %v1388 = vadd.f32 %v746, %v1234
        %v1389 = vadd.f32 %v747, %v1014
        %v1390 = vadd.f32 %v748, %v1016
        %v1391 = vadd.f32 %v749, %v1239
        %v1392 = vadd.f32 %v750, %v1018
        %v1393 = vadd.f32 %v751, %v1020
        %v1394 = vadd.f32 %v752, %v1242
        %v1395 = vadd.f32 %v753, %v1024
        %v1396 = vadd.f32 %v754, %v1026
        %v1397 = vadd.f32 %v755, %v1247
        %v1398 = vadd.f32 %v756, %v1028
        %v1399 = vadd.f32 %v757, %v1030
        %v1400 = vadd.f32 %v758, %v1250
        %v1401 = vadd.f32 %v759, %v1034
        %v1402 = vadd.f32 %v760, %v1036
        %v1403 = vadd.f32 %v761, %v1255
        %v1404 = vadd.f32 %v762, %v1038
        %v1405 = vadd.f32 %v763, %v1040
        %v1406 = vadd.f32 %v764, %v1258
        %v1407 = vadd.f32 %v765, %v1044
        %v1408 = vadd.f32 %v766, %v1046
        %v1409 = vadd.f32 %v767, %v1263
        %v1410 = vadd.f32 %v768, %v1048
        %v1411 = vadd.f32 %v769, %v1050
        %v1412 = vadd.f32 %v770, %v1266
        %v1413 = vadd.f32 %v771, %v1054
        %v1414 = vadd.f32 %v772, %v1056
        %v1415 = vadd.f32 %v773, %v1271
        %v1416 = vadd.f32 %v774, %v1058
        %v1417 = vadd.f32 %v775, %v1060
        %v1418 = vadd.f32 %v776, %v1274
        %v1419 = vadd.f32 %v777, %v1064
        %v1420 = vadd.f32 %v778, %v1066
        %v1421 = vadd.f32 %v779, %v1279
        %v1422 = vadd.f32 %v780, %v1068
        %v1423 = vadd.f32 %v781, %v1070
        %v1424 = vadd.f32 %v782, %v1282
        %v1425 = vadd.f32 %v783, %v1074
        %v1426 = vadd.f32 %v784, %v1076
        %v1427 = vadd.f32 %v785, %v1287
        %v1428 = vadd.f32 %v786, %v1078
        %v1429 = vadd.f32 %v787, %v1080
        %v1430 = vadd.f32 %v788, %v1290
        %v1431 = vadd.f32 %v789, %v1084
        %v1432 = vadd.f32 %v790, %v1086
        %v1433 = vadd.f32 %v791, %v1295
        %v1434 = vadd.f32 %v792, %v1088
        %v1435 = vadd.f32 %v793, %v1090
        %v1436 = vadd.f32 %v794, %v1298
        %v1437 = vadd.f32 %v795, %v1094
        %v1438 = vadd.f32 %v796, %v1096
        %v1439 = vadd.f32 %v797, %v1303
        %v1440 = vadd.f32 %v798, %v1098
        %v1441 = vadd.f32 %v799, %v1100
        %v1442 = vadd.f32 %v800, %v1306
        %v1443 = vadd.f32 %v801, %v1104
        %v1444 = vadd.f32 %v802, %v1106
        %v1445 = vadd.f32 %v803, %v1311
        %v1446 = vadd.f32 %v804, %v1108
        %v1447 = vadd.f32 %v805, %v1110
        %v1448 = vadd.f32 %v806, %v1314
        %v1449 = vadd.f32 %v807, %v1114
        %v1450 = vadd.f32 %v808, %v1116
        %v1451 = vadd.f32 %v809, %v1319
        %v1452 = vadd.f32 %v810, %v1118
        %v1453 = vadd.f32 %v811, %v1120
        %v1454 = vadd.f32 %v812, %v1322
        %v1455 = vadd.f32 %v813, %v1124
        %v1456 = vadd.f32 %v814, %v1126
        %v1457 = vadd.f32 %v815, %v1327
        %v1458 = vadd.f32 %v816, %v1128
        %v1459 = vadd.f32 %v817, %v1130
        %v1460 = vadd.f32 %v818, %v1330
        %v1461 = vadd.f32 %v819, %v1134
        %v1462 = vadd.f32 %v820, %v1136
        %v1463 = vadd.f32 %v821, %v1335
        %v1464 = vadd.f32 %v822, %v1138
        %v1465 = vadd.f32 %v823, %v1140
        %v1466 = vadd.f32 %v824, %v1338
        %v1467 = vadd.f32 %v825, %v1144
        %v1468 = vadd.f32 %v826, %v1146
        %v1469 = vadd.f32 %v827, %v1343
        %v1470 = vadd.f32 %v828, %v1148
        %v1471 = vadd.f32 %v829, %v1150
        %v1472 = vadd.f32 %v830, %v1346
        %v1473 = vadd.f32 %v831, %v1154
        %v1474 = vadd.f32 %v832, %v1156
        %v1475 = vadd.f32 %v833, %v1351
        %v1476 = vadd.f32 %v834, %v1158
        %v1477 = vadd.f32 %v835, %v1160
        %v1478 = vadd.f32 %v836, %v1354
        %v1479 = vadd.f32 %v837, %v1164
        %v1480 = vadd.f32 %v838, %v1166
        %v1481 = vadd.f32 %v839, %v1359
        %v1482 = vadd.f32 %v840, %v1168
        %v1483 = vadd.f32 %v841, %v1170
        %v1484 = vadd.f32 %v842, %v1362
        %1485 = vst [vmem:[#allocation2] sm:$0xff] %v1365
        %1486 = vst [vmem:[#allocation2 + $0x8] sm:$0xff] %v1366
        %1487 = vst [vmem:[#allocation2 + $0x10] sm:$0xff] %v1367
        %1488 = vst [vmem:[#allocation2 + $0x18] sm:$0xff] %v1368
        %1489 = vst [vmem:[#allocation2 + $0x20] sm:$0xff] %v1369
        %1490 = vst [vmem:[#allocation2 + $0x28] sm:$0xff] %v1370
        %1491 = vst [vmem:[#allocation2 + $0x30] sm:$0xff] %v1371
        %1492 = vst [vmem:[#allocation2 + $0x38] sm:$0xff] %v1372
        %1493 = vst [vmem:[#allocation2 + $0x40] sm:$0xff] %v1373
        %1494 = vst [vmem:[#allocation2 + $0x48] sm:$0xff] %v1374
        %1495 = vst [vmem:[#allocation2 + $0x50] sm:$0xff] %v1375
        %1496 = vst [vmem:[#allocation2 + $0x58] sm:$0xff] %v1376
        %1497 = vst [vmem:[#allocation2 + $0x60] sm:$0xff] %v1377
        %1498 = vst [vmem:[#allocation2 + $0x68] sm:$0xff] %v1378
        %1499 = vst [vmem:[#allocation2 + $0x70] sm:$0xff] %v1379
        %1500 = vst [vmem:[#allocation2 + $0x78] sm:$0xff] %v1380
        %1501 = vst [vmem:[#allocation2 + $0x80] sm:$0xff] %v1381
        %1502 = vst [vmem:[#allocation2 + $0x88] sm:$0xff] %v1382
        %1503 = vst [vmem:[#allocation2 + $0x90] sm:$0xff] %v1383
        %1504 = vst [vmem:[#allocation2 + $0x98] sm:$0xff] %v1384
        %1505 = vst [vmem:[#allocation2 + $0xa0] sm:$0xff] %v1385
        %1506 = vst [vmem:[#allocation2 + $0xa8] sm:$0xff] %v1386
        %1507 = vst [vmem:[#allocation2 + $0xb0] sm:$0xff] %v1387
        %1508 = vst [vmem:[#allocation2 + $0xb8] sm:$0xff] %v1388
        %1509 = vst [vmem:[#allocation2 + $0xc0] sm:$0xff] %v1389
        %1510 = vst [vmem:[#allocation2 + $0xc8] sm:$0xff] %v1390
        %1511 = vst [vmem:[#allocation2 + $0xd0] sm:$0xff] %v1391
        %1512 = vst [vmem:[#allocation2 + $0xd8] sm:$0xff] %v1392
        %1513 = vst [vmem:[#allocation2 + $0xe0] sm:$0xff] %v1393
        %1514 = vst [vmem:[#allocation2 + $0xe8] sm:$0xff] %v1394
        %1515 = vst [vmem:[#allocation2 + $0xf0] sm:$0xff] %v1395
        %1516 = vst [vmem:[#allocation2 + $0xf8] sm:$0xff] %v1396
        %1517 = vst [vmem:[#allocation2 + $0x100] sm:$0xff] %v1397
        %1518 = vst [vmem:[#allocation2 + $0x108] sm:$0xff] %v1398
        %1519 = vst [vmem:[#allocation2 + $0x110] sm:$0xff] %v1399
        %1520 = vst [vmem:[#allocation2 + $0x118] sm:$0xff] %v1400
        %1521 = vst [vmem:[#allocation2 + $0x120] sm:$0xff] %v1401
        %1522 = vst [vmem:[#allocation2 + $0x128] sm:$0xff] %v1402
        %1523 = vst [vmem:[#allocation2 + $0x130] sm:$0xff] %v1403
        %1524 = vst [vmem:[#allocation2 + $0x138] sm:$0xff] %v1404
        %1525 = vst [vmem:[#allocation2 + $0x140] sm:$0xff] %v1405
        %1526 = vst [vmem:[#allocation2 + $0x148] sm:$0xff] %v1406
        %1527 = vst [vmem:[#allocation2 + $0x150] sm:$0xff] %v1407
        %1528 = vst [vmem:[#allocation2 + $0x158] sm:$0xff] %v1408
        %1529 = vst [vmem:[#allocation2 + $0x160] sm:$0xff] %v1409
        %1530 = vst [vmem:[#allocation2 + $0x168] sm:$0xff] %v1410
        %1531 = vst [vmem:[#allocation2 + $0x170] sm:$0xff] %v1411
        %1532 = vst [vmem:[#allocation2 + $0x178] sm:$0xff] %v1412
        %1533 = vst [vmem:[#allocation2 + $0x180] sm:$0xff] %v1413
        %1534 = vst [vmem:[#allocation2 + $0x188] sm:$0xff] %v1414
        %1535 = vst [vmem:[#allocation2 + $0x190] sm:$0xff] %v1415
        %1536 = vst [vmem:[#allocation2 + $0x198] sm:$0xff] %v1416
        %1537 = vst [vmem:[#allocation2 + $0x1a0] sm:$0xff] %v1417
        %1538 = vst [vmem:[#allocation2 + $0x1a8] sm:$0xff] %v1418
        %1539 = vst [vmem:[#allocation2 + $0x1b0] sm:$0xff] %v1419
        %1540 = vst [vmem:[#allocation2 + $0x1b8] sm:$0xff] %v1420
        %1541 = vst [vmem:[#allocation2 + $0x1c0] sm:$0xff] %v1421
        %1542 = vst [vmem:[#allocation2 + $0x1c8] sm:$0xff] %v1422
        %1543 = vst [vmem:[#allocation2 + $0x1d0] sm:$0xff] %v1423
        %1544 = vst [vmem:[#allocation2 + $0x1d8] sm:$0xff] %v1424
        %1545 = vst [vmem:[#allocation2 + $0x1e0] sm:$0xff] %v1425
        %1546 = vst [vmem:[#allocation2 + $0x1e8] sm:$0xff] %v1426
        %1547 = vst [vmem:[#allocation2 + $0x1f0] sm:$0xff] %v1427
        %1548 = vst [vmem:[#allocation2 + $0x1f8] sm:$0xff] %v1428
        %1549 = vst [vmem:[#allocation2 + $0x200] sm:$0xff] %v1429
        %1550 = vst [vmem:[#allocation2 + $0x208] sm:$0xff] %v1430
        %1551 = vst [vmem:[#allocation2 + $0x210] sm:$0xff] %v1431
        %1552 = vst [vmem:[#allocation2 + $0x218] sm:$0xff] %v1432
        %1553 = vst [vmem:[#allocation2 + $0x220] sm:$0xff] %v1433
        %1554 = vst [vmem:[#allocation2 + $0x228] sm:$0xff] %v1434
        %1555 = vst [vmem:[#allocation2 + $0x230] sm:$0xff] %v1435
        %1556 = vst [vmem:[#allocation2 + $0x238] sm:$0xff] %v1436
        %1557 = vst [vmem:[#allocation2 + $0x240] sm:$0xff] %v1437
        %1558 = vst [vmem:[#allocation2 + $0x248] sm:$0xff] %v1438
        %1559 = vst [vmem:[#allocation2 + $0x250] sm:$0xff] %v1439
        %1560 = vst [vmem:[#allocation2 + $0x258] sm:$0xff] %v1440
        %1561 = vst [vmem:[#allocation2 + $0x260] sm:$0xff] %v1441
        %1562 = vst [vmem:[#allocation2 + $0x268] sm:$0xff] %v1442
        %1563 = vst [vmem:[#allocation2 + $0x270] sm:$0xff] %v1443
        %1564 = vst [vmem:[#allocation2 + $0x278] sm:$0xff] %v1444
        %1565 = vst [vmem:[#allocation2 + $0x280] sm:$0xff] %v1445
        %1566 = vst [vmem:[#allocation2 + $0x288] sm:$0xff] %v1446
        %1567 = vst [vmem:[#allocation2 + $0x290] sm:$0xff] %v1447
        %1568 = vst [vmem:[#allocation2 + $0x298] sm:$0xff] %v1448
        %1569 = vst [vmem:[#allocation2 + $0x2a0] sm:$0xff] %v1449
        %1570 = vst [vmem:[#allocation2 + $0x2a8] sm:$0xff] %v1450
        %1571 = vst [vmem:[#allocation2 + $0x2b0] sm:$0xff] %v1451
        %1572 = vst [vmem:[#allocation2 + $0x2b8] sm:$0xff] %v1452
        %1573 = vst [vmem:[#allocation2 + $0x2c0] sm:$0xff] %v1453
        %1574 = vst [vmem:[#allocation2 + $0x2c8] sm:$0xff] %v1454
        %1575 = vst [vmem:[#allocation2 + $0x2d0] sm:$0xff] %v1455
        %1576 = vst [vmem:[#allocation2 + $0x2d8] sm:$0xff] %v1456
        %1577 = vst [vmem:[#allocation2 + $0x2e0] sm:$0xff] %v1457
        %1578 = vst [vmem:[#allocation2 + $0x2e8] sm:$0xff] %v1458
        %1579 = vst [vmem:[#allocation2 + $0x2f0] sm:$0xff] %v1459
        %1580 = vst [vmem:[#allocation2 + $0x2f8] sm:$0xff] %v1460
        %1581 = vst [vmem:[#allocation2 + $0x300] sm:$0xff] %v1461
        %1582 = vst [vmem:[#allocation2 + $0x308] sm:$0xff] %v1462
        %1583 = vst [vmem:[#allocation2 + $0x310] sm:$0xff] %v1463
        %1584 = vst [vmem:[#allocation2 + $0x318] sm:$0xff] %v1464
        %1585 = vst [vmem:[#allocation2 + $0x320] sm:$0xff] %v1465
        %1586 = vst [vmem:[#allocation2 + $0x328] sm:$0xff] %v1466
        %1587 = vst [vmem:[#allocation2 + $0x330] sm:$0xff] %v1467
        %1588 = vst [vmem:[#allocation2 + $0x338] sm:$0xff] %v1468
        %1589 = vst [vmem:[#allocation2 + $0x340] sm:$0xff] %v1469
        %1590 = vst [vmem:[#allocation2 + $0x348] sm:$0xff] %v1470
        %1591 = vst [vmem:[#allocation2 + $0x350] sm:$0xff] %v1471
        %1592 = vst [vmem:[#allocation2 + $0x358] sm:$0xff] %v1472
        %1593 = vst [vmem:[#allocation2 + $0x360] sm:$0xff] %v1473
        %1594 = vst [vmem:[#allocation2 + $0x368] sm:$0xff] %v1474
        %1595 = vst [vmem:[#allocation2 + $0x370] sm:$0xff] %v1475
        %1596 = vst [vmem:[#allocation2 + $0x378] sm:$0xff] %v1476
        %1597 = vst [vmem:[#allocation2 + $0x380] sm:$0xff] %v1477
        %1598 = vst [vmem:[#allocation2 + $0x388] sm:$0xff] %v1478
        %1599 = vst [vmem:[#allocation2 + $0x390] sm:$0xff] %v1479
        %1600 = vst [vmem:[#allocation2 + $0x398] sm:$0xff] %v1480
        %1601 = vst [vmem:[#allocation2 + $0x3a0] sm:$0xff] %v1481
        %1602 = vst [vmem:[#allocation2 + $0x3a8] sm:$0xff] %v1482
        %1603 = vst [vmem:[#allocation2 + $0x3b0] sm:$0xff] %v1483
        %1604 = vst [vmem:[#allocation2 + $0x3b8] sm:$0xff] %v1484
        // Predicated region
        $region37: #{tpu_custom_call.1} parent=31 // pred_check
          %p1605 = pneg %p193
        $region38: #{tpu_custom_call.1} parent=31 // pred_check_branch
          %1607 = sbr.rel (%p1605) target = $region40
        $region39: #{tpu_custom_call.1} parent=31 // pred_region
          %v1608 = vld [vmem:[#allocation2] sm:$0xff]
          %v1609 = vld [vmem:[#allocation2 + $0x8] sm:$0xff]
          %v1610 = vld [vmem:[#allocation2 + $0x10] sm:$0xff]
          %v1611 = vld [vmem:[#allocation2 + $0x18] sm:$0xff]
          %v1612 = vld [vmem:[#allocation2 + $0x20] sm:$0xff]
          %v1613 = vld [vmem:[#allocation2 + $0x28] sm:$0xff]
          %v1614 = vld [vmem:[#allocation2 + $0x30] sm:$0xff]
          %v1615 = vld [vmem:[#allocation2 + $0x38] sm:$0xff]
          %v1616 = vld [vmem:[#allocation2 + $0x40] sm:$0xff]
          %v1617 = vld [vmem:[#allocation2 + $0x48] sm:$0xff]
          %v1618 = vld [vmem:[#allocation2 + $0x50] sm:$0xff]
          %v1619 = vld [vmem:[#allocation2 + $0x58] sm:$0xff]
          %v1620 = vld [vmem:[#allocation2 + $0x60] sm:$0xff]
          %v1621 = vld [vmem:[#allocation2 + $0x68] sm:$0xff]
          %v1622 = vld [vmem:[#allocation2 + $0x70] sm:$0xff]
          %v1623 = vld [vmem:[#allocation2 + $0x78] sm:$0xff]
          %v1624 = vld [vmem:[#allocation2 + $0x80] sm:$0xff]
          %v1625 = vld [vmem:[#allocation2 + $0x88] sm:$0xff]
          %v1626 = vld [vmem:[#allocation2 + $0x90] sm:$0xff]
          %v1627 = vld [vmem:[#allocation2 + $0x98] sm:$0xff]
          %v1628 = vld [vmem:[#allocation2 + $0xa0] sm:$0xff]
          %v1629 = vld [vmem:[#allocation2 + $0xa8] sm:$0xff]
          %v1630 = vld [vmem:[#allocation2 + $0xb0] sm:$0xff]
          %v1631 = vld [vmem:[#allocation2 + $0xb8] sm:$0xff]
          %v1632 = vld [vmem:[#allocation2 + $0xc0] sm:$0xff]
          %v1633 = vld [vmem:[#allocation2 + $0xc8] sm:$0xff]
          %v1634 = vld [vmem:[#allocation2 + $0xd0] sm:$0xff]
          %v1635 = vld [vmem:[#allocation2 + $0xd8] sm:$0xff]
          %v1636 = vld [vmem:[#allocation2 + $0xe0] sm:$0xff]
          %v1637 = vld [vmem:[#allocation2 + $0xe8] sm:$0xff]
          %v1638 = vld [vmem:[#allocation2 + $0xf0] sm:$0xff]
          %v1639 = vld [vmem:[#allocation2 + $0xf8] sm:$0xff]
          %v1640 = vld [vmem:[#allocation2 + $0x100] sm:$0xff]
          %v1641 = vld [vmem:[#allocation2 + $0x108] sm:$0xff]
          %v1642 = vld [vmem:[#allocation2 + $0x110] sm:$0xff]
          %v1643 = vld [vmem:[#allocation2 + $0x118] sm:$0xff]
          %v1644 = vld [vmem:[#allocation2 + $0x120] sm:$0xff]
          %v1645 = vld [vmem:[#allocation2 + $0x128] sm:$0xff]
          %v1646 = vld [vmem:[#allocation2 + $0x130] sm:$0xff]
          %v1647 = vld [vmem:[#allocation2 + $0x138] sm:$0xff]
          %v1648 = vld [vmem:[#allocation2 + $0x140] sm:$0xff]
          %v1649 = vld [vmem:[#allocation2 + $0x148] sm:$0xff]
          %v1650 = vld [vmem:[#allocation2 + $0x150] sm:$0xff]
          %v1651 = vld [vmem:[#allocation2 + $0x158] sm:$0xff]
          %v1652 = vld [vmem:[#allocation2 + $0x160] sm:$0xff]
          %v1653 = vld [vmem:[#allocation2 + $0x168] sm:$0xff]
          %v1654 = vld [vmem:[#allocation2 + $0x170] sm:$0xff]
          %v1655 = vld [vmem:[#allocation2 + $0x178] sm:$0xff]
          %v1656 = vld [vmem:[#allocation2 + $0x180] sm:$0xff]
          %v1657 = vld [vmem:[#allocation2 + $0x188] sm:$0xff]
          %v1658 = vld [vmem:[#allocation2 + $0x190] sm:$0xff]
          %v1659 = vld [vmem:[#allocation2 + $0x198] sm:$0xff]
          %v1660 = vld [vmem:[#allocation2 + $0x1a0] sm:$0xff]
          %v1661 = vld [vmem:[#allocation2 + $0x1a8] sm:$0xff]
          %v1662 = vld [vmem:[#allocation2 + $0x1b0] sm:$0xff]
          %v1663 = vld [vmem:[#allocation2 + $0x1b8] sm:$0xff]
          %v1664 = vld [vmem:[#allocation2 + $0x1c0] sm:$0xff]
          %v1665 = vld [vmem:[#allocation2 + $0x1c8] sm:$0xff]
          %v1666 = vld [vmem:[#allocation2 + $0x1d0] sm:$0xff]
          %v1667 = vld [vmem:[#allocation2 + $0x1d8] sm:$0xff]
          %v1668 = vld [vmem:[#allocation2 + $0x1e0] sm:$0xff]
          %v1669 = vld [vmem:[#allocation2 + $0x1e8] sm:$0xff]
          %v1670 = vld [vmem:[#allocation2 + $0x1f0] sm:$0xff]
          %v1671 = vld [vmem:[#allocation2 + $0x1f8] sm:$0xff]
          %v1672 = vld [vmem:[#allocation2 + $0x200] sm:$0xff]
          %v1673 = vld [vmem:[#allocation2 + $0x208] sm:$0xff]
          %v1674 = vld [vmem:[#allocation2 + $0x210] sm:$0xff]
          %v1675 = vld [vmem:[#allocation2 + $0x218] sm:$0xff]
          %v1676 = vld [vmem:[#allocation2 + $0x220] sm:$0xff]
          %v1677 = vld [vmem:[#allocation2 + $0x228] sm:$0xff]
          %v1678 = vld [vmem:[#allocation2 + $0x230] sm:$0xff]
          %v1679 = vld [vmem:[#allocation2 + $0x238] sm:$0xff]
          %v1680 = vld [vmem:[#allocation2 + $0x240] sm:$0xff]
          %v1681 = vld [vmem:[#allocation2 + $0x248] sm:$0xff]
          %v1682 = vld [vmem:[#allocation2 + $0x250] sm:$0xff]
          %v1683 = vld [vmem:[#allocation2 + $0x258] sm:$0xff]
          %v1684 = vld [vmem:[#allocation2 + $0x260] sm:$0xff]
          %v1685 = vld [vmem:[#allocation2 + $0x268] sm:$0xff]
          %v1686 = vld [vmem:[#allocation2 + $0x270] sm:$0xff]
          %v1687 = vld [vmem:[#allocation2 + $0x278] sm:$0xff]
          %v1688 = vld [vmem:[#allocation2 + $0x280] sm:$0xff]
          %v1689 = vld [vmem:[#allocation2 + $0x288] sm:$0xff]
          %v1690 = vld [vmem:[#allocation2 + $0x290] sm:$0xff]
          %v1691 = vld [vmem:[#allocation2 + $0x298] sm:$0xff]
          %v1692 = vld [vmem:[#allocation2 + $0x2a0] sm:$0xff]
          %v1693 = vld [vmem:[#allocation2 + $0x2a8] sm:$0xff]
          %v1694 = vld [vmem:[#allocation2 + $0x2b0] sm:$0xff]
          %v1695 = vld [vmem:[#allocation2 + $0x2b8] sm:$0xff]
          %v1696 = vld [vmem:[#allocation2 + $0x2c0] sm:$0xff]
          %v1697 = vld [vmem:[#allocation2 + $0x2c8] sm:$0xff]
          %v1698 = vld [vmem:[#allocation2 + $0x2d0] sm:$0xff]
          %v1699 = vld [vmem:[#allocation2 + $0x2d8] sm:$0xff]
          %v1700 = vld [vmem:[#allocation2 + $0x2e0] sm:$0xff]
          %v1701 = vld [vmem:[#allocation2 + $0x2e8] sm:$0xff]
          %v1702 = vld [vmem:[#allocation2 + $0x2f0] sm:$0xff]
          %v1703 = vld [vmem:[#allocation2 + $0x2f8] sm:$0xff]
          %v1704 = vld [vmem:[#allocation2 + $0x300] sm:$0xff]
          %v1705 = vld [vmem:[#allocation2 + $0x308] sm:$0xff]
          %v1706 = vld [vmem:[#allocation2 + $0x310] sm:$0xff]
          %v1707 = vld [vmem:[#allocation2 + $0x318] sm:$0xff]
          %v1708 = vld [vmem:[#allocation2 + $0x320] sm:$0xff]
          %v1709 = vld [vmem:[#allocation2 + $0x328] sm:$0xff]
          %v1710 = vld [vmem:[#allocation2 + $0x330] sm:$0xff]
          %v1711 = vld [vmem:[#allocation2 + $0x338] sm:$0xff]
          %v1712 = vld [vmem:[#allocation2 + $0x340] sm:$0xff]
          %v1713 = vld [vmem:[#allocation2 + $0x348] sm:$0xff]
          %v1714 = vld [vmem:[#allocation2 + $0x350] sm:$0xff]
          %v1715 = vld [vmem:[#allocation2 + $0x358] sm:$0xff]
          %v1716 = vld [vmem:[#allocation2 + $0x360] sm:$0xff]
          %v1717 = vld [vmem:[#allocation2 + $0x368] sm:$0xff]
          %v1718 = vld [vmem:[#allocation2 + $0x370] sm:$0xff]
          %v1719 = vld [vmem:[#allocation2 + $0x378] sm:$0xff]
          %v1720 = vld [vmem:[#allocation2 + $0x380] sm:$0xff]
          %v1721 = vld [vmem:[#allocation2 + $0x388] sm:$0xff]
          %v1722 = vld [vmem:[#allocation2 + $0x390] sm:$0xff]
          %v1723 = vld [vmem:[#allocation2 + $0x398] sm:$0xff]
          %v1724 = vld [vmem:[#allocation2 + $0x3a0] sm:$0xff]
          %v1725 = vld [vmem:[#allocation2 + $0x3a8] sm:$0xff]
          %v1726 = vld [vmem:[#allocation2 + $0x3b0] sm:$0xff]
          %v1727 = vld [vmem:[#allocation2 + $0x3b8] sm:$0xff]
          %v1728 = vpack.c.bf16 %v1611, %v1608
          %v1729 = vpack.c.bf16 %v1612, %v1609
          %v1730 = vpack.c.bf16 %v1613, %v1610
          %v1731 = vpack.c.bf16 %v1617, %v1614
          %v1732 = vpack.c.bf16 %v1618, %v1615
          %v1733 = vpack.c.bf16 %v1619, %v1616
          %v1734 = vpack.c.bf16 %v1623, %v1620
          %v1735 = vpack.c.bf16 %v1624, %v1621
          %v1736 = vpack.c.bf16 %v1625, %v1622
          %v1737 = vpack.c.bf16 %v1629, %v1626
          %v1738 = vpack.c.bf16 %v1630, %v1627
          %v1739 = vpack.c.bf16 %v1631, %v1628
          %v1740 = vpack.c.bf16 %v1635, %v1632
          %v1741 = vpack.c.bf16 %v1636, %v1633
          %v1742 = vpack.c.bf16 %v1637, %v1634
          %v1743 = vpack.c.bf16 %v1641, %v1638
          %v1744 = vpack.c.bf16 %v1642, %v1639
          %v1745 = vpack.c.bf16 %v1643, %v1640
          %v1746 = vpack.c.bf16 %v1647, %v1644
          %v1747 = vpack.c.bf16 %v1648, %v1645
          %v1748 = vpack.c.bf16 %v1649, %v1646
          %v1749 = vpack.c.bf16 %v1653, %v1650
          %v1750 = vpack.c.bf16 %v1654, %v1651
          %v1751 = vpack.c.bf16 %v1655, %v1652
          %v1752 = vpack.c.bf16 %v1659, %v1656
          %v1753 = vpack.c.bf16 %v1660, %v1657
          %v1754 = vpack.c.bf16 %v1661, %v1658
          %v1755 = vpack.c.bf16 %v1665, %v1662
          %v1756 = vpack.c.bf16 %v1666, %v1663
          %v1757 = vpack.c.bf16 %v1667, %v1664
          %v1758 = vpack.c.bf16 %v1671, %v1668
          %v1759 = vpack.c.bf16 %v1672, %v1669
          %v1760 = vpack.c.bf16 %v1673, %v1670
          %v1761 = vpack.c.bf16 %v1677, %v1674
          %v1762 = vpack.c.bf16 %v1678, %v1675
          %v1763 = vpack.c.bf16 %v1679, %v1676
          %v1764 = vpack.c.bf16 %v1683, %v1680
          %v1765 = vpack.c.bf16 %v1684, %v1681
          %v1766 = vpack.c.bf16 %v1685, %v1682
          %v1767 = vpack.c.bf16 %v1689, %v1686
          %v1768 = vpack.c.bf16 %v1690, %v1687
          %v1769 = vpack.c.bf16 %v1691, %v1688
          %v1770 = vpack.c.bf16 %v1695, %v1692
          %v1771 = vpack.c.bf16 %v1696, %v1693
          %v1772 = vpack.c.bf16 %v1697, %v1694
          %v1773 = vpack.c.bf16 %v1701, %v1698
          %v1774 = vpack.c.bf16 %v1702, %v1699
          %v1775 = vpack.c.bf16 %v1703, %v1700
          %v1776 = vpack.c.bf16 %v1707, %v1704
          %v1777 = vpack.c.bf16 %v1708, %v1705
          %v1778 = vpack.c.bf16 %v1709, %v1706
          %v1779 = vpack.c.bf16 %v1713, %v1710
          %v1780 = vpack.c.bf16 %v1714, %v1711
          %v1781 = vpack.c.bf16 %v1715, %v1712
          %v1782 = vpack.c.bf16 %v1719, %v1716
          %v1783 = vpack.c.bf16 %v1720, %v1717
          %v1784 = vpack.c.bf16 %v1721, %v1718
          %v1785 = vpack.c.bf16 %v1725, %v1722
          %v1786 = vpack.c.bf16 %v1726, %v1723
          %v1787 = vpack.c.bf16 %v1727, %v1724
          %v1848 = vunpack.c.l.b16 %v1728
          %v1849 = vunpack.c.l.b16 %v1729
          %v1850 = vunpack.c.l.b16 %v1730
          %v1851 = vunpack.c.h.b16 %v1728
          %v1852 = vunpack.c.h.b16 %v1729
          %v1853 = vunpack.c.h.b16 %v1730
          %v1854 = vunpack.c.l.b16 %v1731
          %v1855 = vunpack.c.l.b16 %v1732
          %v1856 = vunpack.c.l.b16 %v1733
          %v1857 = vunpack.c.h.b16 %v1731
          %v1858 = vunpack.c.h.b16 %v1732
          %v1859 = vunpack.c.h.b16 %v1733
          %v1860 = vunpack.c.l.b16 %v1734
          %v1861 = vunpack.c.l.b16 %v1735
          %v1862 = vunpack.c.l.b16 %v1736
          %v1863 = vunpack.c.h.b16 %v1734
          %v1864 = vunpack.c.h.b16 %v1735
          %v1865 = vunpack.c.h.b16 %v1736
          %v1866 = vunpack.c.l.b16 %v1737
          %v1867 = vunpack.c.l.b16 %v1738
          %v1868 = vunpack.c.l.b16 %v1739
          %v1869 = vunpack.c.h.b16 %v1737
          %v1870 = vunpack.c.h.b16 %v1738
          %v1871 = vunpack.c.h.b16 %v1739
          %v1872 = vunpack.c.l.b16 %v1740
          %v1873 = vunpack.c.l.b16 %v1741
          %v1874 = vunpack.c.l.b16 %v1742
          %v1875 = vunpack.c.h.b16 %v1740
          %v1876 = vunpack.c.h.b16 %v1741
          %v1877 = vunpack.c.h.b16 %v1742
          %v1878 = vunpack.c.l.b16 %v1743
          %v1879 = vunpack.c.l.b16 %v1744
          %v1880 = vunpack.c.l.b16 %v1745
          %v1881 = vunpack.c.h.b16 %v1743
          %v1882 = vunpack.c.h.b16 %v1744
          %v1883 = vunpack.c.h.b16 %v1745
          %v1884 = vunpack.c.l.b16 %v1746
          %v1885 = vunpack.c.l.b16 %v1747
          %v1886 = vunpack.c.l.b16 %v1748
          %v1887 = vunpack.c.h.b16 %v1746
          %v1888 = vunpack.c.h.b16 %v1747
          %v1889 = vunpack.c.h.b16 %v1748
          %v1890 = vunpack.c.l.b16 %v1749
          %v1891 = vunpack.c.l.b16 %v1750
          %v1892 = vunpack.c.l.b16 %v1751
          %v1893 = vunpack.c.h.b16 %v1749
          %v1894 = vunpack.c.h.b16 %v1750
          %v1895 = vunpack.c.h.b16 %v1751
          %v1896 = vunpack.c.l.b16 %v1752
          %v1897 = vunpack.c.l.b16 %v1753
          %v1898 = vunpack.c.l.b16 %v1754
          %v1899 = vunpack.c.h.b16 %v1752
          %v1900 = vunpack.c.h.b16 %v1753
          %v1901 = vunpack.c.h.b16 %v1754
          %v1902 = vunpack.c.l.b16 %v1755
          %v1903 = vunpack.c.l.b16 %v1756
          %v1904 = vunpack.c.l.b16 %v1757
          %v1905 = vunpack.c.h.b16 %v1755
          %v1906 = vunpack.c.h.b16 %v1756
          %v1907 = vunpack.c.h.b16 %v1757
          %v1908 = vunpack.c.l.b16 %v1758
          %v1909 = vunpack.c.l.b16 %v1759
          %v1910 = vunpack.c.l.b16 %v1760
          %v1911 = vunpack.c.h.b16 %v1758
          %v1912 = vunpack.c.h.b16 %v1759
          %v1913 = vunpack.c.h.b16 %v1760
          %v1914 = vunpack.c.l.b16 %v1761
          %v1915 = vunpack.c.l.b16 %v1762
          %v1916 = vunpack.c.l.b16 %v1763
          %v1917 = vunpack.c.h.b16 %v1761
          %v1918 = vunpack.c.h.b16 %v1762
          %v1919 = vunpack.c.h.b16 %v1763
          %v1920 = vunpack.c.l.b16 %v1764
          %v1921 = vunpack.c.l.b16 %v1765
          %v1922 = vunpack.c.l.b16 %v1766
          %v1923 = vunpack.c.h.b16 %v1764
          %v1924 = vunpack.c.h.b16 %v1765
          %v1925 = vunpack.c.h.b16 %v1766
          %v1926 = vunpack.c.l.b16 %v1767
          %v1927 = vunpack.c.l.b16 %v1768
          %v1928 = vunpack.c.l.b16 %v1769
          %v1929 = vunpack.c.h.b16 %v1767
          %v1930 = vunpack.c.h.b16 %v1768
          %v1931 = vunpack.c.h.b16 %v1769
          %v1932 = vunpack.c.l.b16 %v1770
          %v1933 = vunpack.c.l.b16 %v1771
          %v1934 = vunpack.c.l.b16 %v1772
          %v1935 = vunpack.c.h.b16 %v1770
          %v1936 = vunpack.c.h.b16 %v1771
          %v1937 = vunpack.c.h.b16 %v1772
          %v1938 = vunpack.c.l.b16 %v1773
          %v1939 = vunpack.c.l.b16 %v1774
          %v1940 = vunpack.c.l.b16 %v1775
          %v1941 = vunpack.c.h.b16 %v1773
          %v1942 = vunpack.c.h.b16 %v1774
          %v1943 = vunpack.c.h.b16 %v1775
          %v1944 = vunpack.c.l.b16 %v1776
          %v1945 = vunpack.c.l.b16 %v1777
          %v1946 = vunpack.c.l.b16 %v1778
          %v1947 = vunpack.c.h.b16 %v1776
          %v1948 = vunpack.c.h.b16 %v1777
          %v1949 = vunpack.c.h.b16 %v1778
          %v1950 = vunpack.c.l.b16 %v1779
          %v1951 = vunpack.c.l.b16 %v1780
          %v1952 = vunpack.c.l.b16 %v1781
          %v1953 = vunpack.c.h.b16 %v1779
          %v1954 = vunpack.c.h.b16 %v1780
          %v1955 = vunpack.c.h.b16 %v1781
          %v1956 = vunpack.c.l.b16 %v1782
          %v1957 = vunpack.c.l.b16 %v1783
          %v1958 = vunpack.c.l.b16 %v1784
          %v1959 = vunpack.c.h.b16 %v1782
          %v1960 = vunpack.c.h.b16 %v1783
          %v1961 = vunpack.c.h.b16 %v1784
          %v1962 = vunpack.c.l.b16 %v1785
          %v1963 = vunpack.c.l.b16 %v1786
          %v1964 = vunpack.c.l.b16 %v1787
          %v1965 = vunpack.c.h.b16 %v1785
          %v1966 = vunpack.c.h.b16 %v1786
          %v1967 = vunpack.c.h.b16 %v1787
          %v1968 = vpack.c.b16 %v1849, %v1848
          %v1969 = vpack.c.b16 %v1850, %v1850
          %v1970 = vpack.c.b16 %v1852, %v1851
          %v1971 = vpack.c.b16 %v1853, %v1853
          %v1972 = vpack.c.b16 %v1855, %v1854
          %v1973 = vpack.c.b16 %v1856, %v1856
          %v1974 = vpack.c.b16 %v1858, %v1857
          %v1975 = vpack.c.b16 %v1859, %v1859
          %v1976 = vpack.c.b16 %v1861, %v1860
          %v1977 = vpack.c.b16 %v1862, %v1862
          %v1978 = vpack.c.b16 %v1864, %v1863
          %v1979 = vpack.c.b16 %v1865, %v1865
          %v1980 = vpack.c.b16 %v1867, %v1866
          %v1981 = vpack.c.b16 %v1868, %v1868
          %v1982 = vpack.c.b16 %v1870, %v1869
          %v1983 = vpack.c.b16 %v1871, %v1871
          %v1984 = vpack.c.b16 %v1873, %v1872
          %v1985 = vpack.c.b16 %v1874, %v1874
          %v1986 = vpack.c.b16 %v1876, %v1875
          %v1987 = vpack.c.b16 %v1877, %v1877
          %v1988 = vpack.c.b16 %v1879, %v1878
          %v1989 = vpack.c.b16 %v1880, %v1880
          %v1990 = vpack.c.b16 %v1882, %v1881
          %v1991 = vpack.c.b16 %v1883, %v1883
          %v1992 = vpack.c.b16 %v1885, %v1884
          %v1993 = vpack.c.b16 %v1886, %v1886
          %v1994 = vpack.c.b16 %v1888, %v1887
          %v1995 = vpack.c.b16 %v1889, %v1889
          %v1996 = vpack.c.b16 %v1891, %v1890
          %v1997 = vpack.c.b16 %v1892, %v1892
          %v1998 = vpack.c.b16 %v1894, %v1893
          %v1999 = vpack.c.b16 %v1895, %v1895
          %v2000 = vpack.c.b16 %v1897, %v1896
          %v2001 = vpack.c.b16 %v1898, %v1898
          %v2002 = vpack.c.b16 %v1900, %v1899
          %v2003 = vpack.c.b16 %v1901, %v1901
          %v2004 = vpack.c.b16 %v1903, %v1902
          %v2005 = vpack.c.b16 %v1904, %v1904
          %v2006 = vpack.c.b16 %v1906, %v1905
          %v2007 = vpack.c.b16 %v1907, %v1907
          %v2008 = vpack.c.b16 %v1909, %v1908
          %v2009 = vpack.c.b16 %v1910, %v1910
          %v2010 = vpack.c.b16 %v1912, %v1911
          %v2011 = vpack.c.b16 %v1913, %v1913
          %v2012 = vpack.c.b16 %v1915, %v1914
          %v2013 = vpack.c.b16 %v1916, %v1916
          %v2014 = vpack.c.b16 %v1918, %v1917
          %v2015 = vpack.c.b16 %v1919, %v1919
          %v2016 = vpack.c.b16 %v1921, %v1920
          %v2017 = vpack.c.b16 %v1922, %v1922
          %v2018 = vpack.c.b16 %v1924, %v1923
          %v2019 = vpack.c.b16 %v1925, %v1925
          %v2020 = vpack.c.b16 %v1927, %v1926
          %v2021 = vpack.c.b16 %v1928, %v1928
          %v2022 = vpack.c.b16 %v1930, %v1929
          %v2023 = vpack.c.b16 %v1931, %v1931
          %v2024 = vpack.c.b16 %v1933, %v1932
          %v2025 = vpack.c.b16 %v1934, %v1934
          %v2026 = vpack.c.b16 %v1936, %v1935
          %v2027 = vpack.c.b16 %v1937, %v1937
          %v2028 = vpack.c.b16 %v1939, %v1938
          %v2029 = vpack.c.b16 %v1940, %v1940
          %v2030 = vpack.c.b16 %v1942, %v1941
          %v2031 = vpack.c.b16 %v1943, %v1943
          %v2032 = vpack.c.b16 %v1945, %v1944
          %v2033 = vpack.c.b16 %v1946, %v1946
          %v2034 = vpack.c.b16 %v1948, %v1947
          %v2035 = vpack.c.b16 %v1949, %v1949
          %v2036 = vpack.c.b16 %v1951, %v1950
          %v2037 = vpack.c.b16 %v1952, %v1952
          %v2038 = vpack.c.b16 %v1954, %v1953
          %v2039 = vpack.c.b16 %v1955, %v1955
          %v2040 = vpack.c.b16 %v1957, %v1956
          %v2041 = vpack.c.b16 %v1958, %v1958
          %v2042 = vpack.c.b16 %v1960, %v1959
          %v2043 = vpack.c.b16 %v1961, %v1961
          %v2044 = vpack.c.b16 %v1963, %v1962
          %v2045 = vpack.c.b16 %v1964, %v1964
          %v2046 = vpack.c.b16 %v1966, %v1965
          %v2047 = vpack.c.b16 %v1967, %v1967
          %2128 = vst [vmem:[%s183] sm:$0xff] %v1968
          %2129 = vst [vmem:[%s183 + $0x8] sm:$0xf] %v1969
          %2130 = vst [vmem:[%s183 + $0xc] sm:$0xff] %v1970
          %2131 = vst [vmem:[%s183 + $0x14] sm:$0xf] %v1971
          %2132 = vst [vmem:[%s183 + $0x18] sm:$0xff] %v1972
          %2133 = vst [vmem:[%s183 + $0x20] sm:$0xf] %v1973
          %2134 = vst [vmem:[%s183 + $0x24] sm:$0xff] %v1974
          %2135 = vst [vmem:[%s183 + $0x2c] sm:$0xf] %v1975
          %2136 = vst [vmem:[%s183 + $0x30] sm:$0xff] %v1976
          %2137 = vst [vmem:[%s183 + $0x38] sm:$0xf] %v1977
          %2138 = vst [vmem:[%s183 + $0x3c] sm:$0xff] %v1978
          %2139 = vst [vmem:[%s183 + $0x44] sm:$0xf] %v1979
          %2140 = vst [vmem:[%s183 + $0x48] sm:$0xff] %v1980
          %2141 = vst [vmem:[%s183 + $0x50] sm:$0xf] %v1981
          %2142 = vst [vmem:[%s183 + $0x54] sm:$0xff] %v1982
          %2143 = vst [vmem:[%s183 + $0x5c] sm:$0xf] %v1983
          %2144 = vst [vmem:[%s183 + $0x60] sm:$0xff] %v1984
          %2145 = vst [vmem:[%s183 + $0x68] sm:$0xf] %v1985
          %2146 = vst [vmem:[%s183 + $0x6c] sm:$0xff] %v1986
          %2147 = vst [vmem:[%s183 + $0x74] sm:$0xf] %v1987
          %2148 = vst [vmem:[%s183 + $0x78] sm:$0xff] %v1988
          %2149 = vst [vmem:[%s183 + $0x80] sm:$0xf] %v1989
          %2150 = vst [vmem:[%s183 + $0x84] sm:$0xff] %v1990
          %2151 = vst [vmem:[%s183 + $0x8c] sm:$0xf] %v1991
          %2152 = vst [vmem:[%s183 + $0x90] sm:$0xff] %v1992
          %2153 = vst [vmem:[%s183 + $0x98] sm:$0xf] %v1993
          %2154 = vst [vmem:[%s183 + $0x9c] sm:$0xff] %v1994
          %2155 = vst [vmem:[%s183 + $0xa4] sm:$0xf] %v1995
          %2156 = vst [vmem:[%s183 + $0xa8] sm:$0xff] %v1996
          %2157 = vst [vmem:[%s183 + $0xb0] sm:$0xf] %v1997
          %2158 = vst [vmem:[%s183 + $0xb4] sm:$0xff] %v1998
          %2159 = vst [vmem:[%s183 + $0xbc] sm:$0xf] %v1999
          %2160 = vst [vmem:[%s183 + $0xc0] sm:$0xff] %v2000
          %2161 = vst [vmem:[%s183 + $0xc8] sm:$0xf] %v2001
          %2162 = vst [vmem:[%s183 + $0xcc] sm:$0xff] %v2002
          %2163 = vst [vmem:[%s183 + $0xd4] sm:$0xf] %v2003
          %2164 = vst [vmem:[%s183 + $0xd8] sm:$0xff] %v2004
          %2165 = vst [vmem:[%s183 + $0xe0] sm:$0xf] %v2005
          %2166 = vst [vmem:[%s183 + $0xe4] sm:$0xff] %v2006
          %2167 = vst [vmem:[%s183 + $0xec] sm:$0xf] %v2007
          %2168 = vst [vmem:[%s183 + $0xf0] sm:$0xff] %v2008
          %2169 = vst [vmem:[%s183 + $0xf8] sm:$0xf] %v2009
          %2170 = vst [vmem:[%s183 + $0xfc] sm:$0xff] %v2010
          %2171 = vst [vmem:[%s183 + $0x104] sm:$0xf] %v2011
          %2172 = vst [vmem:[%s183 + $0x108] sm:$0xff] %v2012
          %2173 = vst [vmem:[%s183 + $0x110] sm:$0xf] %v2013
          %2174 = vst [vmem:[%s183 + $0x114] sm:$0xff] %v2014
          %2175 = vst [vmem:[%s183 + $0x11c] sm:$0xf] %v2015
          %2176 = vst [vmem:[%s183 + $0x120] sm:$0xff] %v2016
          %2177 = vst [vmem:[%s183 + $0x128] sm:$0xf] %v2017
          %2178 = vst [vmem:[%s183 + $0x12c] sm:$0xff] %v2018
          %2179 = vst [vmem:[%s183 + $0x134] sm:$0xf] %v2019
          %2180 = vst [vmem:[%s183 + $0x138] sm:$0xff] %v2020
          %2181 = vst [vmem:[%s183 + $0x140] sm:$0xf] %v2021
          %2182 = vst [vmem:[%s183 + $0x144] sm:$0xff] %v2022
          %2183 = vst [vmem:[%s183 + $0x14c] sm:$0xf] %v2023
          %2184 = vst [vmem:[%s183 + $0x150] sm:$0xff] %v2024
          %2185 = vst [vmem:[%s183 + $0x158] sm:$0xf] %v2025
          %2186 = vst [vmem:[%s183 + $0x15c] sm:$0xff] %v2026
          %2187 = vst [vmem:[%s183 + $0x164] sm:$0xf] %v2027
          %2188 = vst [vmem:[%s183 + $0x168] sm:$0xff] %v2028
          %2189 = vst [vmem:[%s183 + $0x170] sm:$0xf] %v2029
          %2190 = vst [vmem:[%s183 + $0x174] sm:$0xff] %v2030
          %2191 = vst [vmem:[%s183 + $0x17c] sm:$0xf] %v2031
          %2192 = vst [vmem:[%s183 + $0x180] sm:$0xff] %v2032
          %2193 = vst [vmem:[%s183 + $0x188] sm:$0xf] %v2033
          %2194 = vst [vmem:[%s183 + $0x18c] sm:$0xff] %v2034
          %2195 = vst [vmem:[%s183 + $0x194] sm:$0xf] %v2035
          %2196 = vst [vmem:[%s183 + $0x198] sm:$0xff] %v2036
          %2197 = vst [vmem:[%s183 + $0x1a0] sm:$0xf] %v2037
          %2198 = vst [vmem:[%s183 + $0x1a4] sm:$0xff] %v2038
          %2199 = vst [vmem:[%s183 + $0x1ac] sm:$0xf] %v2039
          %2200 = vst [vmem:[%s183 + $0x1b0] sm:$0xff] %v2040
          %2201 = vst [vmem:[%s183 + $0x1b8] sm:$0xf] %v2041
          %2202 = vst [vmem:[%s183 + $0x1bc] sm:$0xff] %v2042
          %2203 = vst [vmem:[%s183 + $0x1c4] sm:$0xf] %v2043
          %2204 = vst [vmem:[%s183 + $0x1c8] sm:$0xff] %v2044
          %2205 = vst [vmem:[%s183 + $0x1d0] sm:$0xf] %v2045
          %2206 = vst [vmem:[%s183 + $0x1d4] sm:$0xff] %v2046
          %2207 = vst [vmem:[%s183 + $0x1dc] sm:$0xf] %v2047
        $region40: #{tpu_custom_call.1} parent=31 // pred_fallthru
          _
        %s2208 = sand.u32 %s107, 1
        %s2209 = scalar_lea.sflag [#allocation4], %s2208
        %s2210 = sand.u32 %s107, 1
        %s2211 = smul.addr %s2210, 480
        %s2212 = scalar_lea.vmem [#allocation3], %s2211
        // Predicated region
        $region41: #{tpu_custom_call.1} parent=31 // pred_check
          %p2213 = pneg %p117
        $region42: #{tpu_custom_call.1} parent=31 // pred_check_branch
          %2215 = sbr.rel (%p2213) target = $region44
        $region43: #{tpu_custom_call.1} parent=31 // pred_region
          %s2217 = ssub.s32 7680, 7680
          %2218 = vsyncadd %s2209, %s2217
          %s2219 = smul.addr %s21, 120
          %s2220 = smul.addr %s2219, 64
          %s2221 = scalar_lea.hbm %s3, %s2220
          %s2222 = sshll.u32 %s2212, 4
          %s2223 = int_to_ptr.vmem [resolvable:$true] %s2222
          %2228 = dma.vmem_to_hbm [thread:$0]  %s2223, 7680, %s2221, %s2209, 192, 192, 12
        $region44: #{tpu_custom_call.1} parent=31 // pred_fallthru
          _
      $region32: #{tpu_custom_call.1} parent=5 // pred_fallthru
        _
      %p2229 = scmp.le.s32.totalorder 2, %s12
      // Predicated region
      $region45: #{tpu_custom_call.1} parent=5 // pred_check
        %p2230 = pneg %p2229
      $region46: #{tpu_custom_call.1} parent=5 // pred_check_branch
        %2232 = sbr.rel (%p2230) target = $region48
      $region47: #{tpu_custom_call.1} parent=5 // pred_region
        %s2233 = ssub.s32 %s12, 2
        // Predicated region
        $region49: #{tpu_custom_call.1} parent=47 // pred_check
          %p2234 = pneg %p123
        $region50: #{tpu_custom_call.1} parent=47 // pred_check_branch
          %2236 = sbr.rel (%p2234) target = $region52
        $region51: #{tpu_custom_call.1} parent=47 // pred_region
          %s2237 = sand.u32 %s108, 1
          %s2238 = scalar_lea.sflag [#allocation4], %s2237
          %s2239 = sand.u32 %s108, 1
          %s2240 = smul.addr %s2239, 480
          %s2241 = scalar_lea.vmem [#allocation3], %s2240
          %2242 = dma.done %s2238, 7680
        $region52: #{tpu_custom_call.1} parent=47 // pred_fallthru
          _
      $region48: #{tpu_custom_call.1} parent=5 // pred_fallthru
        _
    $region6: #{tpu_custom_call.1} parent=1 // loop_footer
      %s16 = sadd.s32 1, %s12
    $region7: #{tpu_custom_call.1} parent=1 // loop_footer_branch
      %11 = sbr.rel target = $region3
    $region8: #{tpu_custom_call.1} parent=1 // loop_exit
      _
    %2243 = vsyncpa [#allocation4], 1
    %s2244 = scalar_lea.sflag [#allocation4], 1
    %2245 = vsyncpa %s2244, 1

</llo_original>
